<compile_context>
chip_gen: v6e
topology: v6e:2x2x1
jax: 0.10.0
libtpu: 0.0.40
codegen_flags: <defaults>
</compile_context>

<pallas_src>
import functools

import jax
import jax.numpy as jnp
from jax.experimental import pallas as pl
from jax.experimental.pallas import tpu as pltpu

KMAX = 39                     # largest branch kernel
KPAD = 40                     # packed tap grid (multiple of the chunk size G)
HALO_L = 20                   # left halo of the bottleneck window
HALO_R = KPAD - 1 - HALO_L    # right halo (= 19)
G = 8                         # taps per accumulation chunk -> contraction = G * Cb


# --------------------------- fused Pallas kernel -----------------------------

def _inception_kernel(x_ref, wb_ref, bb_ref, wbr_ref, bbr_ref, wp_ref, bp_ref,
                      o_ref, bott_ref, *, L_true, TL, Cb, Cout):
    j = pl.program_id(1)                      # L-tile index
    W = TL + KPAD - 1                         # window rows (tile + conv halo)
    start = pl.multiple_of(j * TL, TL)        # window start in the padded input

    xwin = x_ref[pl.ds(start, W), :]          # (W, Cin) bf16

    # ---- bottleneck 1x1 (+bias); rows outside the true sequence are zeroed so the
    # ---- branch convs see PyTorch's zero padding of the bottleneck output.
    bott = jnp.dot(xwin, wb_ref[...],
                   preferred_element_type=jnp.float32) + bb_ref[...]          # (W, Cb) f32
    row = j * TL + jax.lax.broadcasted_iota(jnp.int32, (W, 1), 0) - HALO_L
    valid = jnp.logical_and(row >= 0, row < L_true)
    bott_ref[...] = jnp.where(valid, bott, 0.0).astype(jnp.bfloat16)          # bf16 scratch

    # ---- three branch convs as chunked-K im2col matmuls (f32 accumulation).
    # The accumulator lives across a fully-unrolled 5-iteration loop (compiler keeps
    # it resident in vregs/VMEM), equivalent to a VMEM accumulator.
    acc = jnp.zeros((TL, 3 * Cout), jnp.float32)
    for c in range(KPAD // G):
        patch = jnp.concatenate(
            [bott_ref[pl.ds(c * G + g, TL), :] for g in range(G)], axis=-1)   # (TL, G*Cb) bf16
        acc = acc + jnp.dot(patch, wbr_ref[c * G * Cb:(c + 1) * G * Cb, :],
                            preferred_element_type=jnp.float32)
    branches = acc + bbr_ref[...]                                             # (TL, 3*Cout)

    # ---- maxpool(3, stride 1, pad 1) + conv_pool 1x1 -------------------------
    center = xwin[HALO_L:HALO_L + TL, :]                                      # (TL, Cin) bf16
    left = xwin[HALO_L - 1:HALO_L - 1 + TL, :]
    right = xwin[HALO_L + 1:HALO_L + 1 + TL, :]
    orow = j * TL + jax.lax.broadcasted_iota(jnp.int32, (TL, 1), 0)           # global rows
    left = jnp.where(orow >= 1, left, center)          # out-of-sequence neighbour -> centre
    right = jnp.where(orow + 1 < L_true, right, center)
    mp = jnp.maximum(jnp.maximum(left, center), right)                        # (TL, Cin) bf16
    pool = jnp.dot(mp, wp_ref[...],
                   preferred_element_type=jnp.float32) + bp_ref[...]          # (TL, Cout)

    # ---- channel-major, lane-dense store directly in PyTorch (N, C, L) layout
    res = jnp.concatenate([branches, pool], axis=-1)                          # (TL, 4*Cout) f32
    o_ref[...] = jnp.transpose(res, (1, 0)).astype(o_ref.dtype)               # (4*Cout, TL)


# --------------------------- wrapper -----------------------------------------

def _pack_branch_weights(w9, w19, w39, b9, b19, b39):
    """Embed conv9/19/39 weights on the KPAD tap grid -> (KPAD*Cb, 3*Cout)."""
    Cb, Cout = w9.shape[1], w9.shape[2]
    W = jnp.zeros((KPAD, Cb, 3 * Cout), jnp.float32)
    for col, w in enumerate((w9, w19, w39)):
        k = w.shape[0]
        off = HALO_L - k // 2            # aligns PyTorch "padding = k//2" with the halo
        W = W.at[off:off + k, :, col * Cout:(col + 1) * Cout].set(w)
    b = jnp.concatenate([b9, b19, b39], axis=0)
    return W.reshape(KPAD * Cb, 3 * Cout), b


def inception_module(x_ncl, params, *, tile_l=512):
    """x_ncl: (N, Cin, L) PyTorch layout -> (N, 4*Cout, L)."""
    N, Cin, L = x_ncl.shape
    Cb = params["bottleneck"]["w"].shape[2]
    Cout = params["conv9"]["w"].shape[2]
    assert KPAD % G == 0 and HALO_L >= KMAX // 2

    # L tiling: one full-length tile for short sequences, 512-row tiles (lane-dense
    # output stores, VMEM-bounded on v7x / v5e-scoped) for long ones.
    TL = L if L <= tile_l else tile_l
    num_t = pl.cdiv(L, TL)
    L_pad = num_t * TL

    # Input-side relayout + conv/pool halo + bf16 cast in one small wrapper pass.
    # (Only Cin channels; the 4*Cout output relayout is done lane-dense in-kernel.)
    x_lc = jnp.transpose(x_ncl, (0, 2, 1)).astype(jnp.bfloat16)
    x_lc = jnp.pad(x_lc, ((0, 0), (HALO_L, (L_pad - L) + HALO_R), (0, 0)))
    Lp = x_lc.shape[1]                                                   # HALO_L + L_pad + HALO_R

    wb = params["bottleneck"]["w"][0].astype(jnp.bfloat16)               # (Cin, Cb)
    bb = params["bottleneck"]["b"].reshape(1, Cb).astype(jnp.float32)
    wbr_f32, bbr = _pack_branch_weights(
        params["conv9"]["w"], params["conv19"]["w"], params["conv39"]["w"],
        params["conv9"]["b"], params["conv19"]["b"], params["conv39"]["b"])
    wbr = wbr_f32.astype(jnp.bfloat16)                                   # (KPAD*Cb, 3*Cout)
    bbr = bbr.reshape(1, 3 * Cout).astype(jnp.float32)
    wp = params["conv_pool"]["w"][0].astype(jnp.bfloat16)                # (Cin, Cout)
    bp = params["conv_pool"]["b"].reshape(1, Cout).astype(jnp.float32)

    kernel = functools.partial(_inception_kernel, L_true=L, TL=TL, Cb=Cb, Cout=Cout)

    flops = 2 * N * L_pad * Cb * (Cin + KPAD * 3 * Cout) + 2 * N * L_pad * Cin * Cout
    bytes_accessed = (x_lc.size * 2 + wb.size * 2 + wbr.size * 2 + wp.size * 2
                      + N * 4 * Cout * L_pad * 4)

    out = pl.pallas_call(
        kernel,
        out_shape=jax.ShapeDtypeStruct((N, 4 * Cout, L_pad), jnp.float32),
        grid_spec=pltpu.PrefetchScalarGridSpec(
            num_scalar_prefetch=0,
            grid=(N, num_t),
            in_specs=[
                # Padded activations: fetched once per sample (block index is constant
                # in j, so Pallas skips the re-DMA across L tiles).
                pl.BlockSpec((None, Lp, Cin), lambda n, j: (n, 0, 0)),
                pl.BlockSpec((Cin, Cb), lambda n, j: (0, 0)),
                pl.BlockSpec((1, Cb), lambda n, j: (0, 0)),
                pl.BlockSpec((KPAD * Cb, 3 * Cout), lambda n, j: (0, 0)),
                pl.BlockSpec((1, 3 * Cout), lambda n, j: (0, 0)),
                pl.BlockSpec((Cin, Cout), lambda n, j: (0, 0)),
                pl.BlockSpec((1, Cout), lambda n, j: (0, 0)),
            ],
            # Channel-major output block: lane dim = TL (multiple of 128 for long L).
            out_specs=pl.BlockSpec((None, 4 * Cout, TL), lambda n, j: (n, 0, j)),
            scratch_shapes=[pltpu.VMEM((TL + KPAD - 1, Cb), jnp.bfloat16)],
        ),
        compiler_params=pltpu.CompilerParams(
            dimension_semantics=("parallel", "parallel")),
        cost_estimate=pl.CostEstimate(flops=int(flops), transcendentals=0,
                                      bytes_accessed=int(bytes_accessed)),
    )(x_lc, wb, bb, wbr, bbr, wp, bp)

    return out if L_pad == L else out[:, :, :L]


# --------------------------- pure-JAX f32 reference --------------------------

def _conv1d_ref(x, w, b, pad):
    K = w.shape[0]
    L = x.shape[1]
    xp = jnp.pad(x, ((0, 0), (pad, pad), (0, 0)))
    out = sum(jnp.einsum("nlc,co->nlo", xp[:, t:t + L, :], w[t]) for t in range(K))
    return out + b


def inception_module_ref(x_ncl, params):
    x = jnp.transpose(x_ncl, (0, 2, 1)).astype(jnp.float32)
    L = x.shape[1]
    bott = _conv1d_ref(x, params["bottleneck"]["w"], params["bottleneck"]["b"], 0)
    outs = [_conv1d_ref(bott, params[f"conv{k}"]["w"], params[f"conv{k}"]["b"], k // 2)
            for k in (9, 19, 39)]
    xp = jnp.pad(x, ((0, 0), (1, 1), (0, 0)), constant_values=-jnp.inf)
    mp = jnp.maximum(jnp.maximum(xp[:, :L], xp[:, 1:L + 1]), xp[:, 2:L + 2])
    outs.append(_conv1d_ref(mp, params["conv_pool"]["w"], params["conv_pool"]["b"], 0))
    return jnp.transpose(jnp.concatenate(outs, axis=-1), (0, 2, 1))


# --------------------------- parameter init ----------------------------------

def _conv_param(key, K, cin, cout, std=0.05):
    kw, kb = jax.random.split(key)
    return {"w": std * jax.random.normal(kw, (K, cin, cout), jnp.float32),
            "b": std * jax.random.normal(kb, (cout,), jnp.float32)}


def init_params(key, in_channels, out_channels, bottleneck_channels=32):
    keys = jax.random.split(key, 5)
    return {
        "bottleneck": _conv_param(keys[0], 1, in_channels, bottleneck_channels),
        "conv9": _conv_param(keys[1], 9, bottleneck_channels, out_channels),
        "conv19": _conv_param(keys[2], 19, bottleneck_channels, out_channels),
        "conv39": _conv_param(keys[3], 39, bottleneck_channels, out_channels),
        "conv_pool": _conv_param(keys[4], 1, in_channels, out_channels),
    }


# --------------------------- main ---------------------------------------------

if __name__ == "__main__":
    # InceptionModule(in_channels=4, out_channels=8, kernel_sizes=[9,19,39], bottleneck=32)
    in_channels, out_channels, N, L = 4, 8, 2, 16

    key = jax.random.PRNGKey(0)
    kx, kp = jax.random.split(key)
    x = jax.random.normal(kx, (N, in_channels, L), jnp.float32)   # PyTorch (N, C, L)
    params = init_params(kp, in_channels, out_channels)

    out = jax.block_until_ready(inception_module(x, params))
    ref = jax.block_until_ready(inception_module_ref(x, params))

    assert out.shape == (N, 4 * out_channels, L), out.shape
    assert bool(jnp.all(jnp.isfinite(out)))
    # bf16 MXU operands (f32 accumulate) vs f32 reference -> loosened tolerance.
    max_err = float(jnp.max(jnp.abs(out - ref)))
    assert bool(jnp.allclose(out, ref, atol=2e-2, rtol=2e-2)), max_err
    print("KERNEL_OK")
</pallas_src>

<mosaic_0001>
module attributes {stable_mosaic.version = 11 : i64} {
  func.func @_inception_kernel(%arg0: i32, %arg1: i32, %arg2: memref<1x55x4xbf16, #tpu.memory_space<vmem>>, %arg3: memref<4x32xbf16, #tpu.memory_space<vmem>>, %arg4: memref<1x32xf32, #tpu.memory_space<vmem>>, %arg5: memref<1280x24xbf16, #tpu.memory_space<vmem>>, %arg6: memref<1x24xf32, #tpu.memory_space<vmem>>, %arg7: memref<4x8xbf16, #tpu.memory_space<vmem>>, %arg8: memref<1x8xf32, #tpu.memory_space<vmem>>, %arg9: memref<1x32x16xf32, #tpu.memory_space<vmem>>, %arg10: memref<55x32xbf16, #tpu.memory_space<vmem>>) attributes {dimension_semantics = [#tpu.dimension_semantics<parallel>, #tpu.dimension_semantics<parallel>], iteration_bounds = array<i64: 2, 1>, scalar_prefetch = 0 : i64, scratch_operands = 1 : i64, tpu.core_type = #tpu.core_type<tc>, window_params = [{transform_indices = @transform_0, window_bounds = array<i64: 1, 55, 4>}, {pipeline_mode = #tpu.pipeline_mode<synchronous>, transform_indices = @transform_1, window_bounds = array<i64: 4, 32>}, {pipeline_mode = #tpu.pipeline_mode<synchronous>, transform_indices = @transform_2, window_bounds = array<i64: 1, 32>}, {pipeline_mode = #tpu.pipeline_mode<synchronous>, transform_indices = @transform_3, window_bounds = array<i64: 1280, 24>}, {pipeline_mode = #tpu.pipeline_mode<synchronous>, transform_indices = @transform_4, window_bounds = array<i64: 1, 24>}, {pipeline_mode = #tpu.pipeline_mode<synchronous>, transform_indices = @transform_5, window_bounds = array<i64: 4, 8>}, {pipeline_mode = #tpu.pipeline_mode<synchronous>, transform_indices = @transform_6, window_bounds = array<i64: 1, 8>}, {transform_indices = @transform_7, window_bounds = array<i64: 1, 32, 16>}]} {
    %c16_i32 = arith.constant 16 : i32
    %0 = arith.muli %arg1, %c16_i32 : i32
    %1 = tpu.assume_multiple %0, 16 : i32
    %c0 = arith.constant 0 : index
    %2 = arith.index_cast %1 : i32 to index
    %c0_0 = arith.constant 0 : index
    %3 = vector.load %arg2[%c0, %2, %c0_0] : memref<1x55x4xbf16, #tpu.memory_space<vmem>>, vector<1x55x4xbf16>
    %4 = vector.shape_cast %3 : vector<1x55x4xbf16> to vector<55x4xbf16>
    %c0_1 = arith.constant 0 : index
    %c0_2 = arith.constant 0 : index
    %5 = vector.load %arg3[%c0_1, %c0_2] : memref<4x32xbf16, #tpu.memory_space<vmem>>, vector<4x32xbf16>
    %cst = arith.constant dense<0.000000e+00> : vector<55x32xf32>
    %6 = tpu.matmul %4, %5, %cst {dimension_numbers = #tpu.dot_dimension_numbers<[1], [0], [0], [1], [0, 0, 1, 1], [], []>} : vector<55x4xbf16>, vector<4x32xbf16>, vector<55x32xf32> -> vector<55x32xf32>
    %c0_3 = arith.constant 0 : index
    %c0_4 = arith.constant 0 : index
    %7 = vector.load %arg4[%c0_3, %c0_4] : memref<1x32xf32, #tpu.memory_space<vmem>>, vector<1x32xf32>
    %8 = vector.broadcast %7 : vector<1x32xf32> to vector<55x32xf32>
    %9 = arith.addf %6, %8 : vector<55x32xf32>
    %c16_i32_5 = arith.constant 16 : i32
    %10 = arith.muli %arg1, %c16_i32_5 : i32
    %11 = tpu.iota {dimensions = array<i32: 0>} : vector<55x1xi32>
    %12 = vector.broadcast %10 : i32 to vector<55x1xi32>
    %13 = arith.addi %12, %11 : vector<55x1xi32>
    %c20_i32 = arith.constant 20 : i32
    %14 = vector.broadcast %c20_i32 : i32 to vector<55x1xi32>
    %15 = arith.subi %13, %14 : vector<55x1xi32>
    %c0_i32 = arith.constant 0 : i32
    %16 = vector.broadcast %c0_i32 : i32 to vector<55x1xi32>
    %17 = arith.cmpi sge, %15, %16 : vector<55x1xi32>
    %c16_i32_6 = arith.constant 16 : i32
    %18 = vector.broadcast %c16_i32_6 : i32 to vector<55x1xi32>
    %19 = arith.cmpi slt, %15, %18 : vector<55x1xi32>
    %20 = arith.andi %17, %19 : vector<55x1xi1>
    %cst_7 = arith.constant 0.000000e+00 : f32
    %21 = vector.shape_cast %20 : vector<55x1xi1> to vector<55x1xi1>
    %22 = vector.broadcast %21 : vector<55x1xi1> to vector<55x32xi1>
    %23 = vector.broadcast %cst_7 : f32 to vector<55x32xf32>
    %24 = arith.select %22, %9, %23 : vector<55x32xi1>, vector<55x32xf32>
    %25 = arith.truncf %24 : vector<55x32xf32> to vector<55x32xbf16>
    %c0_8 = arith.constant 0 : index
    %c0_9 = arith.constant 0 : index
    %26 = vector.load %arg10[%c0_8, %c0_9] : memref<55x32xbf16, #tpu.memory_space<vmem>>, vector<55x32xbf16>
    tpu.vector_store %arg10[%c0_8, %c0_9], %25 {strides = array<i32>} : memref<55x32xbf16, #tpu.memory_space<vmem>>, vector<55x32xbf16>,
    %cst_10 = arith.constant 0.000000e+00 : f32
    %27 = vector.broadcast %cst_10 : f32 to vector<16x24xf32>
    %c0_11 = arith.constant 0 : index
    %c0_12 = arith.constant 0 : index
    %28 = vector.load %arg10[%c0_11, %c0_12] : memref<55x32xbf16, #tpu.memory_space<vmem>>, vector<16x32xbf16>
    %c1 = arith.constant 1 : index
    %c0_13 = arith.constant 0 : index
    %29 = vector.load %arg10[%c1, %c0_13] : memref<55x32xbf16, #tpu.memory_space<vmem>>, vector<16x32xbf16>
    %c2 = arith.constant 2 : index
    %c0_14 = arith.constant 0 : index
    %30 = vector.load %arg10[%c2, %c0_14] : memref<55x32xbf16, #tpu.memory_space<vmem>>, vector<16x32xbf16>
    %c3 = arith.constant 3 : index
    %c0_15 = arith.constant 0 : index
    %31 = vector.load %arg10[%c3, %c0_15] : memref<55x32xbf16, #tpu.memory_space<vmem>>, vector<16x32xbf16>
    %c4 = arith.constant 4 : index
    %c0_16 = arith.constant 0 : index
    %32 = vector.load %arg10[%c4, %c0_16] : memref<55x32xbf16, #tpu.memory_space<vmem>>, vector<16x32xbf16>
    %c5 = arith.constant 5 : index
    %c0_17 = arith.constant 0 : index
    %33 = vector.load %arg10[%c5, %c0_17] : memref<55x32xbf16, #tpu.memory_space<vmem>>, vector<16x32xbf16>
    %c6 = arith.constant 6 : index
    %c0_18 = arith.constant 0 : index
    %34 = vector.load %arg10[%c6, %c0_18] : memref<55x32xbf16, #tpu.memory_space<vmem>>, vector<16x32xbf16>
    %c7 = arith.constant 7 : index
    %c0_19 = arith.constant 0 : index
    %35 = vector.load %arg10[%c7, %c0_19] : memref<55x32xbf16, #tpu.memory_space<vmem>>, vector<16x32xbf16>
    %36 = tpu.concatenate %28, %29, %30, %31, %32, %33, %34, %35 in 1 : vector<16x32xbf16>, vector<16x32xbf16>, vector<16x32xbf16>, vector<16x32xbf16>, vector<16x32xbf16>, vector<16x32xbf16>, vector<16x32xbf16>, vector<16x32xbf16> -> vector<16x256xbf16>
    %c0_20 = arith.constant 0 : index
    %c0_21 = arith.constant 0 : index
    %37 = vector.load %arg5[%c0_20, %c0_21] : memref<1280x24xbf16, #tpu.memory_space<vmem>>, vector<256x24xbf16>
    %cst_22 = arith.constant dense<0.000000e+00> : vector<16x24xf32>
    %38 = tpu.matmul %36, %37, %cst_22 {dimension_numbers = #tpu.dot_dimension_numbers<[1], [0], [0], [1], [0, 0, 1, 1], [], []>} : vector<16x256xbf16>, vector<256x24xbf16>, vector<16x24xf32> -> vector<16x24xf32>
    %39 = arith.addf %27, %38 : vector<16x24xf32>
    %c8 = arith.constant 8 : index
    %c0_23 = arith.constant 0 : index
    %40 = vector.load %arg10[%c8, %c0_23] : memref<55x32xbf16, #tpu.memory_space<vmem>>, vector<16x32xbf16>
    %c9 = arith.constant 9 : index
    %c0_24 = arith.constant 0 : index
    %41 = vector.load %arg10[%c9, %c0_24] : memref<55x32xbf16, #tpu.memory_space<vmem>>, vector<16x32xbf16>
    %c10 = arith.constant 10 : index
    %c0_25 = arith.constant 0 : index
    %42 = vector.load %arg10[%c10, %c0_25] : memref<55x32xbf16, #tpu.memory_space<vmem>>, vector<16x32xbf16>
    %c11 = arith.constant 11 : index
    %c0_26 = arith.constant 0 : index
    %43 = vector.load %arg10[%c11, %c0_26] : memref<55x32xbf16, #tpu.memory_space<vmem>>, vector<16x32xbf16>
    %c12 = arith.constant 12 : index
    %c0_27 = arith.constant 0 : index
    %44 = vector.load %arg10[%c12, %c0_27] : memref<55x32xbf16, #tpu.memory_space<vmem>>, vector<16x32xbf16>
    %c13 = arith.constant 13 : index
    %c0_28 = arith.constant 0 : index
    %45 = vector.load %arg10[%c13, %c0_28] : memref<55x32xbf16, #tpu.memory_space<vmem>>, vector<16x32xbf16>
    %c14 = arith.constant 14 : index
    %c0_29 = arith.constant 0 : index
    %46 = vector.load %arg10[%c14, %c0_29] : memref<55x32xbf16, #tpu.memory_space<vmem>>, vector<16x32xbf16>
    %c15 = arith.constant 15 : index
    %c0_30 = arith.constant 0 : index
    %47 = vector.load %arg10[%c15, %c0_30] : memref<55x32xbf16, #tpu.memory_space<vmem>>, vector<16x32xbf16>
    %48 = tpu.concatenate %40, %41, %42, %43, %44, %45, %46, %47 in 1 : vector<16x32xbf16>, vector<16x32xbf16>, vector<16x32xbf16>, vector<16x32xbf16>, vector<16x32xbf16>, vector<16x32xbf16>, vector<16x32xbf16>, vector<16x32xbf16> -> vector<16x256xbf16>
    %c256 = arith.constant 256 : index
    %c0_31 = arith.constant 0 : index
    %49 = vector.load %arg5[%c256, %c0_31] : memref<1280x24xbf16, #tpu.memory_space<vmem>>, vector<256x24xbf16>
    %cst_32 = arith.constant dense<0.000000e+00> : vector<16x24xf32>
    %50 = tpu.matmul %48, %49, %cst_32 {dimension_numbers = #tpu.dot_dimension_numbers<[1], [0], [0], [1], [0, 0, 1, 1], [], []>} : vector<16x256xbf16>, vector<256x24xbf16>, vector<16x24xf32> -> vector<16x24xf32>
    %51 = arith.addf %39, %50 : vector<16x24xf32>
    %c16 = arith.constant 16 : index
    %c0_33 = arith.constant 0 : index
    %52 = vector.load %arg10[%c16, %c0_33] : memref<55x32xbf16, #tpu.memory_space<vmem>>, vector<16x32xbf16>
    %c17 = arith.constant 17 : index
    %c0_34 = arith.constant 0 : index
    %53 = vector.load %arg10[%c17, %c0_34] : memref<55x32xbf16, #tpu.memory_space<vmem>>, vector<16x32xbf16>
    %c18 = arith.constant 18 : index
    %c0_35 = arith.constant 0 : index
    %54 = vector.load %arg10[%c18, %c0_35] : memref<55x32xbf16, #tpu.memory_space<vmem>>, vector<16x32xbf16>
    %c19 = arith.constant 19 : index
    %c0_36 = arith.constant 0 : index
    %55 = vector.load %arg10[%c19, %c0_36] : memref<55x32xbf16, #tpu.memory_space<vmem>>, vector<16x32xbf16>
    %c20 = arith.constant 20 : index
    %c0_37 = arith.constant 0 : index
    %56 = vector.load %arg10[%c20, %c0_37] : memref<55x32xbf16, #tpu.memory_space<vmem>>, vector<16x32xbf16>
    %c21 = arith.constant 21 : index
    %c0_38 = arith.constant 0 : index
    %57 = vector.load %arg10[%c21, %c0_38] : memref<55x32xbf16, #tpu.memory_space<vmem>>, vector<16x32xbf16>
    %c22 = arith.constant 22 : index
    %c0_39 = arith.constant 0 : index
    %58 = vector.load %arg10[%c22, %c0_39] : memref<55x32xbf16, #tpu.memory_space<vmem>>, vector<16x32xbf16>
    %c23 = arith.constant 23 : index
    %c0_40 = arith.constant 0 : index
    %59 = vector.load %arg10[%c23, %c0_40] : memref<55x32xbf16, #tpu.memory_space<vmem>>, vector<16x32xbf16>
    %60 = tpu.concatenate %52, %53, %54, %55, %56, %57, %58, %59 in 1 : vector<16x32xbf16>, vector<16x32xbf16>, vector<16x32xbf16>, vector<16x32xbf16>, vector<16x32xbf16>, vector<16x32xbf16>, vector<16x32xbf16>, vector<16x32xbf16> -> vector<16x256xbf16>
    %c512 = arith.constant 512 : index
    %c0_41 = arith.constant 0 : index
    %61 = vector.load %arg5[%c512, %c0_41] : memref<1280x24xbf16, #tpu.memory_space<vmem>>, vector<256x24xbf16>
    %cst_42 = arith.constant dense<0.000000e+00> : vector<16x24xf32>
    %62 = tpu.matmul %60, %61, %cst_42 {dimension_numbers = #tpu.dot_dimension_numbers<[1], [0], [0], [1], [0, 0, 1, 1], [], []>} : vector<16x256xbf16>, vector<256x24xbf16>, vector<16x24xf32> -> vector<16x24xf32>
    %63 = arith.addf %51, %62 : vector<16x24xf32>
    %c24 = arith.constant 24 : index
    %c0_43 = arith.constant 0 : index
    %64 = vector.load %arg10[%c24, %c0_43] : memref<55x32xbf16, #tpu.memory_space<vmem>>, vector<16x32xbf16>
    %c25 = arith.constant 25 : index
    %c0_44 = arith.constant 0 : index
    %65 = vector.load %arg10[%c25, %c0_44] : memref<55x32xbf16, #tpu.memory_space<vmem>>, vector<16x32xbf16>
    %c26 = arith.constant 26 : index
    %c0_45 = arith.constant 0 : index
    %66 = vector.load %arg10[%c26, %c0_45] : memref<55x32xbf16, #tpu.memory_space<vmem>>, vector<16x32xbf16>
    %c27 = arith.constant 27 : index
    %c0_46 = arith.constant 0 : index
    %67 = vector.load %arg10[%c27, %c0_46] : memref<55x32xbf16, #tpu.memory_space<vmem>>, vector<16x32xbf16>
    %c28 = arith.constant 28 : index
    %c0_47 = arith.constant 0 : index
    %68 = vector.load %arg10[%c28, %c0_47] : memref<55x32xbf16, #tpu.memory_space<vmem>>, vector<16x32xbf16>
    %c29 = arith.constant 29 : index
    %c0_48 = arith.constant 0 : index
    %69 = vector.load %arg10[%c29, %c0_48] : memref<55x32xbf16, #tpu.memory_space<vmem>>, vector<16x32xbf16>
    %c30 = arith.constant 30 : index
    %c0_49 = arith.constant 0 : index
    %70 = vector.load %arg10[%c30, %c0_49] : memref<55x32xbf16, #tpu.memory_space<vmem>>, vector<16x32xbf16>
    %c31 = arith.constant 31 : index
    %c0_50 = arith.constant 0 : index
    %71 = vector.load %arg10[%c31, %c0_50] : memref<55x32xbf16, #tpu.memory_space<vmem>>, vector<16x32xbf16>
    %72 = tpu.concatenate %64, %65, %66, %67, %68, %69, %70, %71 in 1 : vector<16x32xbf16>, vector<16x32xbf16>, vector<16x32xbf16>, vector<16x32xbf16>, vector<16x32xbf16>, vector<16x32xbf16>, vector<16x32xbf16>, vector<16x32xbf16> -> vector<16x256xbf16>
    %c768 = arith.constant 768 : index
    %c0_51 = arith.constant 0 : index
    %73 = vector.load %arg5[%c768, %c0_51] : memref<1280x24xbf16, #tpu.memory_space<vmem>>, vector<256x24xbf16>
    %cst_52 = arith.constant dense<0.000000e+00> : vector<16x24xf32>
    %74 = tpu.matmul %72, %73, %cst_52 {dimension_numbers = #tpu.dot_dimension_numbers<[1], [0], [0], [1], [0, 0, 1, 1], [], []>} : vector<16x256xbf16>, vector<256x24xbf16>, vector<16x24xf32> -> vector<16x24xf32>
    %75 = arith.addf %63, %74 : vector<16x24xf32>
    %c32 = arith.constant 32 : index
    %c0_53 = arith.constant 0 : index
    %76 = vector.load %arg10[%c32, %c0_53] : memref<55x32xbf16, #tpu.memory_space<vmem>>, vector<16x32xbf16>
    %c33 = arith.constant 33 : index
    %c0_54 = arith.constant 0 : index
    %77 = vector.load %arg10[%c33, %c0_54] : memref<55x32xbf16, #tpu.memory_space<vmem>>, vector<16x32xbf16>
    %c34 = arith.constant 34 : index
    %c0_55 = arith.constant 0 : index
    %78 = vector.load %arg10[%c34, %c0_55] : memref<55x32xbf16, #tpu.memory_space<vmem>>, vector<16x32xbf16>
    %c35 = arith.constant 35 : index
    %c0_56 = arith.constant 0 : index
    %79 = vector.load %arg10[%c35, %c0_56] : memref<55x32xbf16, #tpu.memory_space<vmem>>, vector<16x32xbf16>
    %c36 = arith.constant 36 : index
    %c0_57 = arith.constant 0 : index
    %80 = vector.load %arg10[%c36, %c0_57] : memref<55x32xbf16, #tpu.memory_space<vmem>>, vector<16x32xbf16>
    %c37 = arith.constant 37 : index
    %c0_58 = arith.constant 0 : index
    %81 = vector.load %arg10[%c37, %c0_58] : memref<55x32xbf16, #tpu.memory_space<vmem>>, vector<16x32xbf16>
    %c38 = arith.constant 38 : index
    %c0_59 = arith.constant 0 : index
    %82 = vector.load %arg10[%c38, %c0_59] : memref<55x32xbf16, #tpu.memory_space<vmem>>, vector<16x32xbf16>
    %c39 = arith.constant 39 : index
    %c0_60 = arith.constant 0 : index
    %83 = vector.load %arg10[%c39, %c0_60] : memref<55x32xbf16, #tpu.memory_space<vmem>>, vector<16x32xbf16>
    %84 = tpu.concatenate %76, %77, %78, %79, %80, %81, %82, %83 in 1 : vector<16x32xbf16>, vector<16x32xbf16>, vector<16x32xbf16>, vector<16x32xbf16>, vector<16x32xbf16>, vector<16x32xbf16>, vector<16x32xbf16>, vector<16x32xbf16> -> vector<16x256xbf16>
    %c1024 = arith.constant 1024 : index
    %c0_61 = arith.constant 0 : index
    %85 = vector.load %arg5[%c1024, %c0_61] : memref<1280x24xbf16, #tpu.memory_space<vmem>>, vector<256x24xbf16>
    %cst_62 = arith.constant dense<0.000000e+00> : vector<16x24xf32>
    %86 = tpu.matmul %84, %85, %cst_62 {dimension_numbers = #tpu.dot_dimension_numbers<[1], [0], [0], [1], [0, 0, 1, 1], [], []>} : vector<16x256xbf16>, vector<256x24xbf16>, vector<16x24xf32> -> vector<16x24xf32>
    %87 = arith.addf %75, %86 : vector<16x24xf32>
    %c0_63 = arith.constant 0 : index
    %c0_64 = arith.constant 0 : index
    %88 = vector.load %arg6[%c0_63, %c0_64] : memref<1x24xf32, #tpu.memory_space<vmem>>, vector<1x24xf32>
    %89 = vector.broadcast %88 : vector<1x24xf32> to vector<16x24xf32>
    %90 = arith.addf %87, %89 : vector<16x24xf32>
    %91 = vector.extract_strided_slice %4 {offsets = [20, 0], sizes = [16, 4], strides = [1, 1]} : vector<55x4xbf16> to vector<16x4xbf16>
    %92 = vector.extract_strided_slice %4 {offsets = [19, 0], sizes = [16, 4], strides = [1, 1]} : vector<55x4xbf16> to vector<16x4xbf16>
    %93 = vector.extract_strided_slice %4 {offsets = [21, 0], sizes = [16, 4], strides = [1, 1]} : vector<55x4xbf16> to vector<16x4xbf16>
    %c16_i32_65 = arith.constant 16 : i32
    %94 = arith.muli %arg1, %c16_i32_65 : i32
    %95 = tpu.iota {dimensions = array<i32: 0>} : vector<16x1xi32>
    %96 = vector.broadcast %94 : i32 to vector<16x1xi32>
    %97 = arith.addi %96, %95 : vector<16x1xi32>
    %c1_i32 = arith.constant 1 : i32
    %98 = vector.broadcast %c1_i32 : i32 to vector<16x1xi32>
    %99 = arith.cmpi sge, %97, %98 : vector<16x1xi32>
    %100 = vector.shape_cast %99 : vector<16x1xi1> to vector<16x1xi1>
    %101 = vector.broadcast %100 : vector<16x1xi1> to vector<16x4xi1>
    %102 = arith.select %101, %92, %91 : vector<16x4xi1>, vector<16x4xbf16>
    %c1_i32_66 = arith.constant 1 : i32
    %103 = vector.broadcast %c1_i32_66 : i32 to vector<16x1xi32>
    %104 = arith.addi %97, %103 : vector<16x1xi32>
    %c16_i32_67 = arith.constant 16 : i32
    %105 = vector.broadcast %c16_i32_67 : i32 to vector<16x1xi32>
    %106 = arith.cmpi slt, %104, %105 : vector<16x1xi32>
    %107 = vector.shape_cast %106 : vector<16x1xi1> to vector<16x1xi1>
    %108 = vector.broadcast %107 : vector<16x1xi1> to vector<16x4xi1>
    %109 = arith.select %108, %93, %91 : vector<16x4xi1>, vector<16x4xbf16>
    %110 = arith.maximumf %102, %91 : vector<16x4xbf16>
    %111 = arith.maximumf %110, %109 : vector<16x4xbf16>
    %c0_68 = arith.constant 0 : index
    %c0_69 = arith.constant 0 : index
    %112 = vector.load %arg7[%c0_68, %c0_69] : memref<4x8xbf16, #tpu.memory_space<vmem>>, vector<4x8xbf16>
    %cst_70 = arith.constant dense<0.000000e+00> : vector<16x8xf32>
    %113 = tpu.matmul %111, %112, %cst_70 {dimension_numbers = #tpu.dot_dimension_numbers<[1], [0], [0], [1], [0, 0, 1, 1], [], []>} : vector<16x4xbf16>, vector<4x8xbf16>, vector<16x8xf32> -> vector<16x8xf32>
    %c0_71 = arith.constant 0 : index
    %c0_72 = arith.constant 0 : index
    %114 = vector.load %arg8[%c0_71, %c0_72] : memref<1x8xf32, #tpu.memory_space<vmem>>, vector<1x8xf32>
    %115 = vector.broadcast %114 : vector<1x8xf32> to vector<16x8xf32>
    %116 = arith.addf %113, %115 : vector<16x8xf32>
    %117 = tpu.concatenate %90, %116 in 1 : vector<16x24xf32>, vector<16x8xf32> -> vector<16x32xf32>
    %118 = tpu.transpose %117, [1, 0] : vector<16x32xf32> -> vector<32x16xf32>
    %c0_73 = arith.constant 0 : index
    %c0_74 = arith.constant 0 : index
    %c0_75 = arith.constant 0 : index
    %119 = vector.load %arg9[%c0_73, %c0_74, %c0_75] : memref<1x32x16xf32, #tpu.memory_space<vmem>>, vector<1x32x16xf32>
    %120 = vector.shape_cast %119 : vector<1x32x16xf32> to vector<32x16xf32>
    %121 = vector.shape_cast %118 : vector<32x16xf32> to vector<1x32x16xf32>
    tpu.vector_store %arg9[%c0_73, %c0_74, %c0_75], %121 {strides = array<i32>} : memref<1x32x16xf32, #tpu.memory_space<vmem>>, vector<1x32x16xf32>,
    return
  }
  func.func @transform_0(%arg0: i32, %arg1: i32) -> (i32, i32, i32) {
    %c0_i32 = arith.constant 0 : i32
    %c0_i32_0 = arith.constant 0 : i32
    %c0_i32_1 = arith.constant 0 : i32
    return %arg0, %c0_i32, %c0_i32_0 : i32, i32, i32
  }
  func.func @transform_1(%arg0: i32, %arg1: i32) -> (i32, i32) {
    %c0_i32 = arith.constant 0 : i32
    %c0_i32_0 = arith.constant 0 : i32
    %c0_i32_1 = arith.constant 0 : i32
    return %c0_i32, %c0_i32_0 : i32, i32
  }
  func.func @transform_2(%arg0: i32, %arg1: i32) -> (i32, i32) {
    %c0_i32 = arith.constant 0 : i32
    %c0_i32_0 = arith.constant 0 : i32
    %c0_i32_1 = arith.constant 0 : i32
    return %c0_i32, %c0_i32_0 : i32, i32
  }
  func.func @transform_3(%arg0: i32, %arg1: i32) -> (i32, i32) {
    %c0_i32 = arith.constant 0 : i32
    %c0_i32_0 = arith.constant 0 : i32
    %c0_i32_1 = arith.constant 0 : i32
    return %c0_i32, %c0_i32_0 : i32, i32
  }
  func.func @transform_4(%arg0: i32, %arg1: i32) -> (i32, i32) {
    %c0_i32 = arith.constant 0 : i32
    %c0_i32_0 = arith.constant 0 : i32
    %c0_i32_1 = arith.constant 0 : i32
    return %c0_i32, %c0_i32_0 : i32, i32
  }
  func.func @transform_5(%arg0: i32, %arg1: i32) -> (i32, i32) {
    %c0_i32 = arith.constant 0 : i32
    %c0_i32_0 = arith.constant 0 : i32
    %c0_i32_1 = arith.constant 0 : i32
    return %c0_i32, %c0_i32_0 : i32, i32
  }
  func.func @transform_6(%arg0: i32, %arg1: i32) -> (i32, i32) {
    %c0_i32 = arith.constant 0 : i32
    %c0_i32_0 = arith.constant 0 : i32
    %c0_i32_1 = arith.constant 0 : i32
    return %c0_i32, %c0_i32_0 : i32, i32
  }
  func.func @transform_7(%arg0: i32, %arg1: i32) -> (i32, i32, i32) {
    %c0_i32 = arith.constant 0 : i32
    %c0_i32_0 = arith.constant 0 : i32
    return %arg0, %c0_i32, %arg1 : i32, i32, i32
  }
}

</mosaic_0001>

<llo_original>
// kernel: tpu_custom_call.1
$region0: #{tpu_custom_call.1}
  #allocation0 [shape = 'u32[]', space=smem, size = 0x4, offset = 0x4, fixed_abs, tag = 'smem constant byte address 0x4 - core index']
  #allocation1 [shape = 'u32[144,128]{1,0:T(1,128)}', space=vmem, size = 0x12000, scoped, tag = 'internal scratch']
  #allocation2 [shape = 'bf16[55,32]{1,0:T(8,128)(2,1)}', space=vmem, size = 0x3800, scoped, tag = 'scratch operand']
  %s0 = inlined_call_operand.vmem [shape: bf16[2,55,4], index: 0, kind: input, shape index: {}]
  %s1 = inlined_call_operand.vmem [shape: bf16[4,32], index: 1, kind: input, shape index: {}]
  %s2 = inlined_call_operand.vmem [shape: f32[1,32], index: 2, kind: input, shape index: {}]
  %s3 = inlined_call_operand.vmem [shape: bf16[1280,24], index: 3, kind: input, shape index: {}]
  %s4 = inlined_call_operand.vmem [shape: f32[1,24], index: 4, kind: input, shape index: {}]
  %s5 = inlined_call_operand.vmem [shape: bf16[4,8], index: 5, kind: input, shape index: {}]
  %s6 = inlined_call_operand.vmem [shape: f32[1,8], index: 6, kind: input, shape index: {}]
  %s7 = inlined_call_operand.vmem [shape: f32[2,32,16], index: 7, kind: output, shape index: {}]
  %s8 = sld [smem:[#allocation0]]
  $region61: #{tpu_custom_call.1} parent=0
    _
  %s10 = ssub.s32 1, %s8
  %s11 = scalar_select 0, %s10, %s8
  loop: start=0, step=1, limit=4
  $region2: #{tpu_custom_call.1} parent=0 // loop_pre_header
    _
  $region3: #{tpu_custom_call.1} parent=0 // loop_header
    %s13 = sphi 0, %s17
    %p14 = scmp.ge.s32.totalorder %s13, 4
    %s20 = sphi 0, %s32
    %s21 = sphi 0, %s28
    %s22 = sphi 0, %s20
    %s23 = sphi 0, %s21
    %s24 = sphi 0, %s22
    %s25 = sphi 0, %s23
    %s35 = sphi 0, %s37
    %s38 = sphi 0, %s35
    %s39 = sphi 0, %s38
    %s55 = sphi 0, %s39
    %s59 = sphi 0, %s59
    %s61 = sphi 0, %s59
    %s62 = sphi 0, %s61
    %s76 = sphi 0, %s62
    %s80 = sphi 0, %s80
    %s82 = sphi 0, %s80
    %s83 = sphi 0, %s82
    %s97 = sphi 0, %s83
    %s101 = sphi 0, %s101
    %s103 = sphi 0, %s101
    %s104 = sphi 0, %s103
    %s118 = sphi 0, %s104
    %s122 = sphi 0, %s122
    %s124 = sphi 0, %s122
    %s125 = sphi 0, %s124
    %s139 = sphi 0, %s125
    %s143 = sphi 0, %s143
    %s145 = sphi 0, %s143
    %s146 = sphi 0, %s145
    %s160 = sphi 0, %s146
    %s164 = sphi 0, %s164
    %s166 = sphi 0, %s164
    %s167 = sphi 0, %s166
    %s181 = sphi 0, %s167
    %s189 = sphi 0, %s191
    %s192 = sphi 0, %s189
    %s193 = sphi 0, %s192
    %s209 = sphi 0, %s193
  $region4: #{tpu_custom_call.1} parent=0 // loop_header_branch
    %16 = sbr.rel (%p14) target = $region8
  $region5: #{tpu_custom_call.1} parent=0 // loop_body
    %s18 = ssub.s32 %s13, 1
    %s19 = ssub.s32 %s13, 2
    %s26 = sadd.s32 1, %s21
    %p27 = scmp.ge.s32.totalorder %s26, 1
    %s28 = scalar_select %p27, 0, %s26
    %s29 = sadd.s32 1, %s20
    %s30 = scalar_select %p27, %s29, %s20
    %p31 = scmp.ge.s32.totalorder %s30, 2
    %s32 = scalar_select %p31, 0, %s30
    %s33 = ssub.s32 %s20, %s32
    %p34 = scmp.eq.s32.totalorder %s33, 0
    %s36 = sadd.s32 %s35, 1
    %s37 = scalar_select %p34, %s35, %s36
    %p40 = pneg %p34
    %p41 = scmp.eq.s32.totalorder %s13, 1
    %p42 = por %p40, %p41
    %p43 = scmp.ne.s32.totalorder %s35, %s38
    %p44 = scmp.eq.s32.totalorder %s13, 0
    %p45 = por %p43, %p44
    %p46 = scmp.ne.s32.totalorder %s35, %s38
    %p47 = scmp.eq.s32.totalorder %s18, 1
    %p48 = por %p46, %p47
    %p49 = scmp.ne.s32.totalorder %s38, %s39
    %p50 = scmp.eq.s32.totalorder %s18, 0
    %p51 = por %p49, %p50
    %p52 = scmp.ne.s32.totalorder %s38, %s39
    %p53 = scmp.eq.s32.totalorder %s19, 1
    %p54 = por %p52, %p53
    %p56 = scmp.ne.s32.totalorder %s39, %s55
    %p57 = scmp.eq.s32.totalorder %s19, 0
    %p58 = por %p56, %p57
    %s60 = sadd.s32 %s59, 1
    %p63 = scmp.eq.s32.totalorder %s13, 1
    %p64 = scmp.ne.s32.totalorder %s59, %s61
    %p65 = scmp.eq.s32.totalorder %s13, 0
    %p66 = por %p64, %p65
    %p67 = scmp.ne.s32.totalorder %s59, %s61
    %p68 = scmp.eq.s32.totalorder %s18, 1
    %p69 = por %p67, %p68
    %p70 = scmp.ne.s32.totalorder %s61, %s62
    %p71 = scmp.eq.s32.totalorder %s18, 0
    %p72 = por %p70, %p71
    %p73 = scmp.ne.s32.totalorder %s61, %s62
    %p74 = scmp.eq.s32.totalorder %s19, 1
    %p75 = por %p73, %p74
    %p77 = scmp.ne.s32.totalorder %s62, %s76
    %p78 = scmp.eq.s32.totalorder %s19, 0
    %p79 = por %p77, %p78
    %s81 = sadd.s32 %s80, 1
    %p84 = scmp.eq.s32.totalorder %s13, 1
    %p85 = scmp.ne.s32.totalorder %s80, %s82
    %p86 = scmp.eq.s32.totalorder %s13, 0
    %p87 = por %p85, %p86
    %p88 = scmp.ne.s32.totalorder %s80, %s82
    %p89 = scmp.eq.s32.totalorder %s18, 1
    %p90 = por %p88, %p89
    %p91 = scmp.ne.s32.totalorder %s82, %s83
    %p92 = scmp.eq.s32.totalorder %s18, 0
    %p93 = por %p91, %p92
    %p94 = scmp.ne.s32.totalorder %s82, %s83
    %p95 = scmp.eq.s32.totalorder %s19, 1
    %p96 = por %p94, %p95
    %p98 = scmp.ne.s32.totalorder %s83, %s97
    %p99 = scmp.eq.s32.totalorder %s19, 0
    %p100 = por %p98, %p99
    %s102 = sadd.s32 %s101, 1
    %p105 = scmp.eq.s32.totalorder %s13, 1
    %p106 = scmp.ne.s32.totalorder %s101, %s103
    %p107 = scmp.eq.s32.totalorder %s13, 0
    %p108 = por %p106, %p107
    %p109 = scmp.ne.s32.totalorder %s101, %s103
    %p110 = scmp.eq.s32.totalorder %s18, 1
    %p111 = por %p109, %p110
    %p112 = scmp.ne.s32.totalorder %s103, %s104
    %p113 = scmp.eq.s32.totalorder %s18, 0
    %p114 = por %p112, %p113
    %p115 = scmp.ne.s32.totalorder %s103, %s104
    %p116 = scmp.eq.s32.totalorder %s19, 1
    %p117 = por %p115, %p116
    %p119 = scmp.ne.s32.totalorder %s104, %s118
    %p120 = scmp.eq.s32.totalorder %s19, 0
    %p121 = por %p119, %p120
    %s123 = sadd.s32 %s122, 1
    %p126 = scmp.eq.s32.totalorder %s13, 1
    %p127 = scmp.ne.s32.totalorder %s122, %s124
    %p128 = scmp.eq.s32.totalorder %s13, 0
    %p129 = por %p127, %p128
    %p130 = scmp.ne.s32.totalorder %s122, %s124
    %p131 = scmp.eq.s32.totalorder %s18, 1
    %p132 = por %p130, %p131
    %p133 = scmp.ne.s32.totalorder %s124, %s125
    %p134 = scmp.eq.s32.totalorder %s18, 0
    %p135 = por %p133, %p134
    %p136 = scmp.ne.s32.totalorder %s124, %s125
    %p137 = scmp.eq.s32.totalorder %s19, 1
    %p138 = por %p136, %p137
    %p140 = scmp.ne.s32.totalorder %s125, %s139
    %p141 = scmp.eq.s32.totalorder %s19, 0
    %p142 = por %p140, %p141
    %s144 = sadd.s32 %s143, 1
    %p147 = scmp.eq.s32.totalorder %s13, 1
    %p148 = scmp.ne.s32.totalorder %s143, %s145
    %p149 = scmp.eq.s32.totalorder %s13, 0
    %p150 = por %p148, %p149
    %p151 = scmp.ne.s32.totalorder %s143, %s145
    %p152 = scmp.eq.s32.totalorder %s18, 1
    %p153 = por %p151, %p152
    %p154 = scmp.ne.s32.totalorder %s145, %s146
    %p155 = scmp.eq.s32.totalorder %s18, 0
    %p156 = por %p154, %p155
    %p157 = scmp.ne.s32.totalorder %s145, %s146
    %p158 = scmp.eq.s32.totalorder %s19, 1
    %p159 = por %p157, %p158
    %p161 = scmp.ne.s32.totalorder %s146, %s160
    %p162 = scmp.eq.s32.totalorder %s19, 0
    %p163 = por %p161, %p162
    %s165 = sadd.s32 %s164, 1
    %p168 = scmp.eq.s32.totalorder %s13, 1
    %p169 = scmp.ne.s32.totalorder %s164, %s166
    %p170 = scmp.eq.s32.totalorder %s13, 0
    %p171 = por %p169, %p170
    %p172 = scmp.ne.s32.totalorder %s164, %s166
    %p173 = scmp.eq.s32.totalorder %s18, 1
    %p174 = por %p172, %p173
    %p175 = scmp.ne.s32.totalorder %s166, %s167
    %p176 = scmp.eq.s32.totalorder %s18, 0
    %p177 = por %p175, %p176
    %p178 = scmp.ne.s32.totalorder %s166, %s167
    %p179 = scmp.eq.s32.totalorder %s19, 1
    %p180 = por %p178, %p179
    %p182 = scmp.ne.s32.totalorder %s167, %s181
    %p183 = scmp.eq.s32.totalorder %s19, 0
    %p184 = por %p182, %p183
    %s185 = ssub.s32 %s20, %s32
    %s186 = ssub.s32 %s21, %s28
    %s187 = sor.u32 %s185, %s186
    %p188 = scmp.eq.s32.totalorder %s187, 0
    %s190 = sadd.s32 %s189, 1
    %s191 = scalar_select %p188, %s189, %s190
    %p194 = pneg %p188
    %p195 = scmp.eq.s32.totalorder %s13, 1
    %p196 = por %p194, %p195
    %p197 = scmp.ne.s32.totalorder %s189, %s192
    %p198 = scmp.eq.s32.totalorder %s13, 0
    %p199 = por %p197, %p198
    %p200 = scmp.ne.s32.totalorder %s189, %s192
    %p201 = scmp.eq.s32.totalorder %s18, 1
    %p202 = por %p200, %p201
    %p203 = scmp.ne.s32.totalorder %s192, %s193
    %p204 = scmp.eq.s32.totalorder %s18, 0
    %p205 = por %p203, %p204
    %p206 = scmp.ne.s32.totalorder %s192, %s193
    %p207 = scmp.eq.s32.totalorder %s19, 1
    %p208 = por %p206, %p207
    %p210 = scmp.ne.s32.totalorder %s193, %s209
    %p211 = scmp.eq.s32.totalorder %s19, 0
    %p212 = por %p210, %p211
    %p213 = scmp.le.s32.totalorder 1, %s13
    %p214 = scmp.lt.s32.totalorder %s13, 3
    %p215 = pnand %p213, %p214
    %p216 = pneg %p215
    // Predicated region
    $region9: #{tpu_custom_call.1} parent=5 // pred_check
      _
    $region10: #{tpu_custom_call.1} parent=5 // pred_check_branch
      %218 = sbr.rel (%p215) target = $region12
    $region11: #{tpu_custom_call.1} parent=5 // pred_region
      %s219 = ssub.s32 %s13, 1
      // Predicated region
      $region13: #{tpu_custom_call.1} parent=11 // pred_check
        %p220 = pneg %p72
      $region14: #{tpu_custom_call.1} parent=11 // pred_check_branch
        %222 = sbr.rel (%p220) target = $region16
      $region15: #{tpu_custom_call.1} parent=11 // pred_region
        _
      $region16: #{tpu_custom_call.1} parent=11 // pred_fallthru
        _
      // Predicated region
      $region17: #{tpu_custom_call.1} parent=11 // pred_check
        %p223 = pneg %p93
      $region18: #{tpu_custom_call.1} parent=11 // pred_check_branch
        %225 = sbr.rel (%p223) target = $region20
      $region19: #{tpu_custom_call.1} parent=11 // pred_region
        _
      $region20: #{tpu_custom_call.1} parent=11 // pred_fallthru
        _
      // Predicated region
      $region21: #{tpu_custom_call.1} parent=11 // pred_check
        %p226 = pneg %p114
      $region22: #{tpu_custom_call.1} parent=11 // pred_check_branch
        %228 = sbr.rel (%p226) target = $region24
      $region23: #{tpu_custom_call.1} parent=11 // pred_region
        _
      $region24: #{tpu_custom_call.1} parent=11 // pred_fallthru
        _
      // Predicated region
      $region25: #{tpu_custom_call.1} parent=11 // pred_check
        %p229 = pneg %p135
      $region26: #{tpu_custom_call.1} parent=11 // pred_check_branch
        %231 = sbr.rel (%p229) target = $region28
      $region27: #{tpu_custom_call.1} parent=11 // pred_region
        _
      $region28: #{tpu_custom_call.1} parent=11 // pred_fallthru
        _
      // Predicated region
      $region29: #{tpu_custom_call.1} parent=11 // pred_check
        %p232 = pneg %p156
      $region30: #{tpu_custom_call.1} parent=11 // pred_check_branch
        %234 = sbr.rel (%p232) target = $region32
      $region31: #{tpu_custom_call.1} parent=11 // pred_region
        _
      $region32: #{tpu_custom_call.1} parent=11 // pred_fallthru
        _
      // Predicated region
      $region33: #{tpu_custom_call.1} parent=11 // pred_check
        %p235 = pneg %p177
      $region34: #{tpu_custom_call.1} parent=11 // pred_check_branch
        %237 = sbr.rel (%p235) target = $region36
      $region35: #{tpu_custom_call.1} parent=11 // pred_region
        _
      $region36: #{tpu_custom_call.1} parent=11 // pred_fallthru
        _
    $region12: #{tpu_custom_call.1} parent=5 // pred_fallthru
      _
    %p238 = scmp.lt.s32.totalorder %s13, 2
    // Predicated region
    $region37: #{tpu_custom_call.1} parent=5 // pred_check
      %p239 = pneg %p238
    $region38: #{tpu_custom_call.1} parent=5 // pred_check_branch
      %241 = sbr.rel (%p239) target = $region40
    $region39: #{tpu_custom_call.1} parent=5 // pred_region
      // Predicated region
      $region41: #{tpu_custom_call.1} parent=39 // pred_check
        %p242 = pneg %p45
      $region42: #{tpu_custom_call.1} parent=39 // pred_check_branch
        %244 = sbr.rel (%p242) target = $region44
      $region43: #{tpu_custom_call.1} parent=39 // pred_region
        %p245 = scmp.lt.s32.totalorder %s20, 1
        %s246 = scalar_select %p245, %s20, 1
        %s247 = smul.addr %s246, 7
        %s248 = smul.addr %s247, 4
        %s249 = scalar_lea.vmem %s0, %s248
      $region44: #{tpu_custom_call.1} parent=39 // pred_fallthru
        _
    $region40: #{tpu_custom_call.1} parent=5 // pred_fallthru
      _
    %p250 = scmp.le.s32.totalorder 1, %s13
    %p251 = scmp.lt.s32.totalorder %s13, 3
    %p252 = pnand %p250, %p251
    %p253 = pneg %p252
    // Predicated region
    $region45: #{tpu_custom_call.1} parent=5 // pred_check
      _
    $region46: #{tpu_custom_call.1} parent=5 // pred_check_branch
      %255 = sbr.rel (%p252) target = $region48
    $region47: #{tpu_custom_call.1} parent=5 // pred_region
      %s256 = ssub.s32 %s13, 1
      %p257 = scmp.lt.s32.totalorder %s22, 1
      %s258 = scalar_select %p257, %s22, 1
      %s259 = smul.addr %s258, 7
      %s260 = smul.addr %s259, 4
      %s261 = scalar_lea.vmem %s0, %s260
      %p262 = pneg %p51
      %p263 = pneg %p48
      %p264 = pneg %p72
      %p265 = pneg %p69
      %p266 = pneg %p93
      %p267 = pneg %p90
      %p268 = pneg %p114
      %p269 = pneg %p111
      %p270 = pneg %p135
      %p271 = pneg %p132
      %p272 = pneg %p156
      %p273 = pneg %p153
      %p274 = pneg %p177
      %p275 = pneg %p174
      %p276 = pneg %p205
      %p277 = pneg %p202
      %p278 = scmp.lt.s32.totalorder %s22, 1
      %s279 = scalar_select %p278, %s22, 1
      %p280 = scmp.lt.s32.totalorder %s23, 0
      %s281 = scalar_select %p280, %s23, 0
      %s282 = smul.addr %s279, 4
      %s283 = sadd.s32 %s281, %s282
      %s284 = smul.addr %s283, 8
      %s285 = scalar_lea.vmem %s7, %s284
      %p286 = scmp.lt.s32.totalorder %s22, 1
      %s287 = scalar_select %p286, %s22, 1
      %s288 = smul.addr %s287, 7
      %s289 = smul.addr %s288, 4
      %s290 = scalar_lea.vmem %s0, %s289
      %p291 = scmp.lt.s32.totalorder %s22, 1
      %s292 = scalar_select %p291, %s22, 1
      %p293 = scmp.lt.s32.totalorder %s23, 0
      %s294 = scalar_select %p293, %s23, 0
      %s295 = smul.addr %s292, 4
      %s296 = sadd.s32 %s294, %s295
      %s297 = smul.addr %s296, 8
      %s298 = scalar_lea.vmem %s7, %s297
      %s302 = smul.u32 %s23, 16
      %s303 = sshra.s32 %s302, 3
      %s304 = sand.u32 %s302, 7
      %s305 = smul.addr %s303, 4
      %s306 = scalar_lea.vmem %s290, %s305
      %v307 = vld [vmem:[%s306] sm:$0xf]
      %v308 = vld [vmem:[%s306 + $0x4] sm:$0xf]
      %v309 = vld [vmem:[%s306 + $0x8] sm:$0xf]
      %v310 = vld [vmem:[%s306 + $0xc] sm:$0xf]
      %v311 = vld [vmem:[%s306 + $0x10] sm:$0xf]
      %v312 = vld [vmem:[%s306 + $0x14] sm:$0xf]
      %v313 = vld [vmem:[%s306 + $0x18] sm:$0xf]
      %v314 = vld [vmem:[%s1] sm:$0x3]
      %v315 = vld [vmem:[%s2] sm:$0x1]
      %v317 = vlaneseq
      %v318 = vshrl.u32 %v317, 7
      %v319 = vsub.s32 0, %v318
      %v320 = vrot.slane %v315, %v319
      %v329 = vunpack.c.l.b16 %v307
      %v330 = vunpack.c.l.b16 %v308
      %v331 = vunpack.c.l.b16 %v309
      %v332 = vunpack.c.l.b16 %v310
      %v333 = vunpack.c.l.b16 %v311
      %v334 = vunpack.c.l.b16 %v312
      %v335 = vunpack.c.l.b16 %v313
      %v336 = vpack.c.b16 %v330, %v329
      %v337 = vpack.c.b16 %v332, %v331
      %v338 = vpack.c.b16 %v334, %v333
      %v339 = vpack.c.b16 %v335, %v335
      %vm340 = vcmask 31744
      %v342 = vsel %vm340, %v336, 0
      %v345 = vsel %vm340, %v337, 0
      %v348 = vsel %vm340, %v338, 0
      %v351 = vsel %vm340, %v339, 0
      %vm353 = vcmask 1041408
      %v355 = vsel %vm353, %v314, 0
      %357 = vmatprep.subr.bf16.mxu0 0
      %358 = vmatpush1.bf16.msra.mxu0 0
      %359 = vmatprep.subr.bf16.mxu0 0
      %360 = vmatpush1.bf16.msra.mxu0 0
      %361 = vmatprep.subr.bf16.mxu0 0
      %362 = vmatpush1.bf16.msra.mxu0 0
      %363 = vmatprep.subr.bf16.mxu0 0
      %364 = vmatpush1.bf16.msra.mxu0 0
      %365 = vmatprep.subr.bf16.mxu0 0
      %366 = vmatpush1.bf16.msra.mxu0 0
      %367 = vmatprep.subr.bf16.mxu0 0
      %368 = vmatpush1.bf16.msra.mxu0 0
      %369 = vmatprep.subr.bf16.mxu0 0
      %370 = vmatpush1.bf16.msra.mxu0 0
      %371 = vmatprep.subr.bf16.mxu0 0
      %372 = vmatpush1.bf16.msra.mxu0 %v355
      %373 = vmatprep.subr.bf16.mxu0 0
      %374 = vmatpush2.bf16.msra.mxu0 0
      %375 = vmatprep.subr.bf16.mxu0 0
      %376 = vmatpush2.bf16.msra.mxu0 0
      %377 = vmatprep.subr.bf16.mxu0 0
      %378 = vmatpush2.bf16.msra.mxu0 0
      %379 = vmatprep.subr.bf16.mxu0 0
      %380 = vmatpush2.bf16.msra.mxu0 0
      %381 = vmatprep.subr.bf16.mxu0 0
      %382 = vmatpush2.bf16.msra.mxu0 0
      %383 = vmatprep.subr.bf16.mxu0 0
      %384 = vmatpush2.bf16.msra.mxu0 0
      %385 = vmatprep.subr.bf16.mxu0 0
      %386 = vmatpush2.bf16.msra.mxu0 0
      %387 = vmatprep.subr.bf16.mxu0 0
      %388 = vmatpush2.bf16.msra.mxu0 0
      %389 = vmatprep.mubr.bf16.mxu0 0
      %390 = vmatmul.mubr.bf16.gmra.mxu0 %v342
      %v391 = vpop.f32.mrf.mxu0
      %v392 = vadd.f32 %v320, %v391
      %v393 = vpop.f32.mrf.mxu0
      %v394 = vpop.f32.mrf.mxu0
      %v395 = vadd.f32 %v320, %v394
      %v396 = vpop.f32.mrf.mxu0
      %397 = vmatprep.mubr.bf16.mxu0 0
      %398 = vmatmul.mubr.bf16.gmra.mxu0 %v345
      %v399 = vpop.f32.mrf.mxu0
      %v400 = vadd.f32 %v320, %v399
      %v401 = vpop.f32.mrf.mxu0
      %v402 = vpop.f32.mrf.mxu0
      %v403 = vadd.f32 %v320, %v402
      %v404 = vpop.f32.mrf.mxu0
      %405 = vmatprep.mubr.bf16.mxu0 0
      %406 = vmatmul.mubr.bf16.gmra.mxu0 %v348
      %v407 = vpop.f32.mrf.mxu0
      %v408 = vadd.f32 %v320, %v407
      %v409 = vpop.f32.mrf.mxu0
      %v410 = vpop.f32.mrf.mxu0
      %v411 = vadd.f32 %v320, %v410
      %v412 = vpop.f32.mrf.mxu0
      %413 = vmatprep.mubr.bf16.mxu0 0
      %414 = vmatmul.mubr.bf16.gmra.mxu0 %v351
      %v415 = vpop.f32.mrf.mxu0
      %v416 = vadd.f32 %v320, %v415
      %v417 = vpop.f32.mrf.mxu0
      %v418 = vpop.f32.mrf.mxu0
      %v419 = vpop.f32.mrf.mxu0
      %420 = vdwg.mxu0
      %v421 = vlaneseq
      %v422 = vshrl.u32 %v421, 7
      %v423 = vadd.s32 %v422, 8
      %v424 = vadd.s32 %v422, 16
      %v425 = vadd.s32 %v422, 24
      %v426 = vadd.s32 %v422, 32
      %v427 = vadd.s32 %v422, 40
      %v428 = vadd.s32 %v422, 48
      %v429 = vstv %s302
      %v430 = vadd.s32 %v429, %v422
      %v431 = vadd.s32 %v429, %v423
      %v432 = vadd.s32 %v429, %v424
      %v433 = vadd.s32 %v429, %v425
      %v434 = vadd.s32 %v429, %v426
      %v435 = vadd.s32 %v429, %v427
      %v436 = vadd.s32 %v429, %v428
      %v437 = vsub.s32 %v430, 20
      %v438 = vsub.s32 %v431, 20
      %v439 = vsub.s32 %v432, 20
      %v440 = vsub.s32 %v433, 20
      %v441 = vsub.s32 %v434, 20
      %v442 = vsub.s32 %v435, 20
      %v443 = vsub.s32 %v436, 20
      %vm444 = vcmp.ge.s32.totalorder %v437, 0
      %vm445 = vcmp.ge.s32.totalorder %v438, 0
      %vm446 = vcmp.ge.s32.totalorder %v439, 0
      %vm447 = vcmp.ge.s32.totalorder %v440, 0
      %vm448 = vcmp.ge.s32.totalorder %v441, 0
      %vm449 = vcmp.ge.s32.totalorder %v442, 0
      %vm450 = vcmp.ge.s32.totalorder %v443, 0
      %vm451 = vcmp.lt.s32.totalorder %v437, 16
      %vm452 = vcmp.lt.s32.totalorder %v438, 16
      %vm453 = vcmp.lt.s32.totalorder %v439, 16
      %vm454 = vcmp.lt.s32.totalorder %v440, 16
      %vm455 = vcmp.lt.s32.totalorder %v441, 16
      %vm456 = vcmp.lt.s32.totalorder %v442, 16
      %vm457 = vcmp.lt.s32.totalorder %v443, 16
      %vm458 = vmand %vm444, %vm451
      %vm459 = vmand %vm445, %vm452
      %vm460 = vmand %vm446, %vm453
      %vm461 = vmand %vm447, %vm454
      %vm462 = vmand %vm448, %vm455
      %vm463 = vmand %vm449, %vm456
      %vm464 = vmand %vm450, %vm457
      %v465 = vsel %vm458, 1, 0
      %v466 = vsel %vm459, 1, 0
      %v467 = vsel %vm460, 1, 0
      %v468 = vsel %vm461, 1, 0
      %v469 = vsel %vm462, 1, 0
      %v470 = vsel %vm463, 1, 0
      %v471 = vsel %vm464, 1, 0
      %vm472 = vcmp.eq.s32.totalorder %v465, 1
      %vm473 = vcmp.eq.s32.totalorder %v466, 1
      %vm474 = vcmp.eq.s32.totalorder %v467, 1
      %vm475 = vcmp.eq.s32.totalorder %v468, 1
      %vm476 = vcmp.eq.s32.totalorder %v469, 1
      %vm477 = vcmp.eq.s32.totalorder %v470, 1
      %vm478 = vcmp.eq.s32.totalorder %v471, 1
      %v479 = vsel %vm472, %v392, 0.0
      %v480 = vsel %vm473, %v395, 0.0
      %v481 = vsel %vm474, %v400, 0.0
      %v482 = vsel %vm475, %v403, 0.0
      %v483 = vsel %vm476, %v408, 0.0
      %v484 = vsel %vm477, %v411, 0.0
      %v485 = vsel %vm478, %v416, 0.0
      %v486 = vpack.c.bf16 %v480, %v479
      %v487 = vpack.c.bf16 %v482, %v481
      %v488 = vpack.c.bf16 %v484, %v483
      %v489 = vpack.c.bf16 %v485, %v485
      %v494 = vunpack.c.l.b16 %v486
      %v495 = vunpack.c.h.b16 %v486
      %v496 = vunpack.c.l.b16 %v487
      %v497 = vunpack.c.h.b16 %v487
      %v498 = vunpack.c.l.b16 %v488
      %v499 = vunpack.c.h.b16 %v488
      %v500 = vunpack.c.l.b16 %v489
      %v501 = vpack.c.b16 %v494, %v494
      %v502 = vpack.c.b16 %v495, %v495
      %v503 = vpack.c.b16 %v496, %v496
      %v504 = vpack.c.b16 %v497, %v497
      %v505 = vpack.c.b16 %v498, %v498
      %v506 = vpack.c.b16 %v499, %v499
      %v507 = vpack.c.b16 %v500, %v500
      %vm515 = vcmask 257024
      %516 = vst.msk [vmem:[#allocation2] sm:$0xf] %vm515, %v501
      %517 = vst.msk [vmem:[#allocation2 + $0x4] sm:$0xf] %vm515, %v502
      %518 = vst.msk [vmem:[#allocation2 + $0x8] sm:$0xf] %vm515, %v503
      %519 = vst.msk [vmem:[#allocation2 + $0xc] sm:$0xf] %vm515, %v504
      %520 = vst.msk [vmem:[#allocation2 + $0x10] sm:$0xf] %vm515, %v505
      %521 = vst.msk [vmem:[#allocation2 + $0x14] sm:$0xf] %vm515, %v506
      %vm522 = vcmask 257024
      %vm523 = vsmask.f32 3328
      %vm524 = vmand %vm522, %vm523
      %v525 = vld [vmem:[#allocation2 + $0x18] sm:$0xf]
      %v526 = vsel %vm524, %v507, %v525
      %527 = vst [vmem:[#allocation2 + $0x18] sm:$0xf] %v526
      %v528 = vld [vmem:[#allocation2] sm:$0xf]
      %v529 = vld [vmem:[#allocation2 + $0x4] sm:$0xf]
      %v530 = vld [vmem:[#allocation2 + $0x8] sm:$0x1]
      %v531 = vld [vmem:[#allocation2] sm:$0xe]
      %v532 = vld [vmem:[#allocation2 + $0x8] sm:$0x3]
      %v533 = vld [vmem:[#allocation2] sm:$0xc]
      %v534 = vld [vmem:[#allocation2 + $0x8] sm:$0x7]
      %v535 = vld [vmem:[#allocation2] sm:$0x8]
      %v536 = vld [vmem:[#allocation2 + $0x8] sm:$0xf]
      %v539 = vunpack.c.l.b16 %v528
      %v540 = vunpack.c.l.b16 %v529
      %v541 = vpack.c.b16 %v540, %v539
      %v543 = vunpack.c.l.b16 %v530
      %v544 = vpack.c.b16 %v543, %v543
      %vm545 = vsmask.f32 7424
      %v547 = vshrl.u32 %v541, 16
      %v549 = vshll.u32 %v541, 16
      %v551 = vrot.slane %v549, 1
      %v552 = vor.u32 %v547, %v551
      %v554 = vshll.u32 %v544, 16
      %v556 = vrot.slane %v554, 1
      %v557 = vsel %vm545, %v552, %v556
      %558 = vrot.lane.b32.xlu0 %v557, 32
      %v559 = vpop.permute.xlu0 %558
      %v561 = vunpack.c.l.b16 %v531
      %v562 = vpack.c.b16 %v540, %v561
      %vm563 = vcmask 1046528
      %v564 = vrot.slane %v562, 1
      %v565 = vrot.slane %v544, 1
      %v566 = vsel %vm563, %v564, %v565
      %567 = vrot.lane.b32.xlu0 %v566, 64
      %v568 = vpop.permute.xlu0 %567
      %v570 = vunpack.c.l.b16 %v532
      %v571 = vpack.c.b16 %v570, %v570
      %vm572 = vsmask.f32 6400
      %v574 = vshrl.u32 %v562, 16
      %v576 = vrot.slane %v574, 1
      %v577 = vshll.u32 %v562, 16
      %v579 = vrot.slane %v577, 2
      %v580 = vor.u32 %v576, %v579
      %v582 = vshrl.u32 %v571, 16
      %v584 = vrot.slane %v582, 1
      %v585 = vshll.u32 %v571, 16
      %v587 = vrot.slane %v585, 2
      %v588 = vor.u32 %v584, %v587
      %v589 = vsel %vm572, %v580, %v588
      %590 = vrot.lane.b32.xlu0 %v589, 96
      %v591 = vpop.permute.xlu0 %590
      %v593 = vunpack.c.l.b16 %v533
      %v594 = vpack.c.b16 %v540, %v593
      %vm595 = vcmask 1045504
      %v596 = vrot.slane %v594, 2
      %v597 = vrot.slane %v571, 2
      %v598 = vsel %vm595, %v596, %v597
      %v600 = vunpack.c.l.b16 %v534
      %v601 = vpack.c.b16 %v600, %v600
      %vm602 = vsmask.f32 5376
      %v604 = vshrl.u32 %v594, 16
      %v606 = vrot.slane %v604, 2
      %v607 = vshll.u32 %v594, 16
      %v609 = vrot.slane %v607, 3
      %v610 = vor.u32 %v606, %v609
      %v612 = vshrl.u32 %v601, 16
      %v614 = vrot.slane %v612, 2
      %v615 = vshll.u32 %v601, 16
      %v617 = vrot.slane %v615, 3
      %v618 = vor.u32 %v614, %v617
      %v619 = vsel %vm602, %v610, %v618
      %620 = vrot.lane.b32.xlu0 %v619, 32
      %v621 = vpop.permute.xlu0 %620
      %v623 = vunpack.c.l.b16 %v535
      %v624 = vpack.c.b16 %v540, %v623
      %vm625 = vcmask 1044480
      %v626 = vrot.slane %v624, 3
      %v627 = vrot.slane %v601, 3
      %v628 = vsel %vm625, %v626, %v627
      %629 = vrot.lane.b32.xlu0 %v628, 64
      %v630 = vpop.permute.xlu0 %629
      %v632 = vunpack.c.l.b16 %v536
      %v633 = vpack.c.b16 %v632, %v632
      %vm634 = vsmask.f32 4352
      %v636 = vshrl.u32 %v624, 16
      %v638 = vrot.slane %v636, 3
      %v639 = vshll.u32 %v624, 16
      %v641 = vrot.slane %v639, 4
      %v642 = vor.u32 %v638, %v641
      %v644 = vshrl.u32 %v633, 16
      %v646 = vrot.slane %v644, 3
      %v647 = vshll.u32 %v633, 16
      %v649 = vrot.slane %v647, 4
      %v650 = vor.u32 %v646, %v649
      %v651 = vsel %vm634, %v642, %v650
      %652 = vrot.lane.b32.xlu0 %v651, 96
      %v653 = vpop.permute.xlu0 %652
      %vm654 = vcmask 261120
      %v656 = vsel %vm654, %v541, %v559
      %vm657 = vcmask 523264
      %v659 = vsel %vm657, %v656, %v568
      %vm660 = vcmask 785408
      %v662 = vsel %vm660, %v659, %v591
      %v666 = vsel %vm654, %v598, %v621
      %v668 = vsel %vm657, %v666, %v630
      %v670 = vsel %vm660, %v668, %v653
      %v672 = vld [vmem:[%s3] sm:$0xf]
      %v673 = vld [vmem:[%s3 + $0x4] sm:$0xf]
      %v674 = vld [vmem:[%s3 + $0x8] sm:$0xf]
      %v675 = vld [vmem:[%s3 + $0xc] sm:$0xf]
      %v676 = vld [vmem:[%s3 + $0x10] sm:$0xf]
      %v677 = vld [vmem:[%s3 + $0x14] sm:$0xf]
      %v678 = vld [vmem:[%s3 + $0x18] sm:$0xf]
      %v679 = vld [vmem:[%s3 + $0x1c] sm:$0xf]
      %v680 = vld [vmem:[%s3 + $0x20] sm:$0xf]
      %v681 = vld [vmem:[%s3 + $0x24] sm:$0xf]
      %v682 = vld [vmem:[%s3 + $0x28] sm:$0xf]
      %v683 = vld [vmem:[%s3 + $0x2c] sm:$0xf]
      %v684 = vld [vmem:[%s3 + $0x30] sm:$0xf]
      %v685 = vld [vmem:[%s3 + $0x34] sm:$0xf]
      %v686 = vld [vmem:[%s3 + $0x38] sm:$0xf]
      %v687 = vld [vmem:[%s3 + $0x3c] sm:$0xf]
      %v688 = vld [vmem:[%s3 + $0x40] sm:$0xf]
      %v689 = vld [vmem:[%s3 + $0x44] sm:$0xf]
      %v690 = vld [vmem:[%s3 + $0x48] sm:$0xf]
      %v691 = vld [vmem:[%s3 + $0x4c] sm:$0xf]
      %v692 = vld [vmem:[%s3 + $0x50] sm:$0xf]
      %v693 = vld [vmem:[%s3 + $0x54] sm:$0xf]
      %v694 = vld [vmem:[%s3 + $0x58] sm:$0xf]
      %v695 = vld [vmem:[%s3 + $0x5c] sm:$0xf]
      %v696 = vld [vmem:[%s3 + $0x60] sm:$0xf]
      %v697 = vld [vmem:[%s3 + $0x64] sm:$0xf]
      %v698 = vld [vmem:[%s3 + $0x68] sm:$0xf]
      %v699 = vld [vmem:[%s3 + $0x6c] sm:$0xf]
      %v700 = vld [vmem:[%s3 + $0x70] sm:$0xf]
      %v701 = vld [vmem:[%s3 + $0x74] sm:$0xf]
      %v702 = vld [vmem:[%s3 + $0x78] sm:$0xf]
      %v703 = vld [vmem:[%s3 + $0x7c] sm:$0xf]
      %v704 = vld [vmem:[#allocation2 + $0xc] sm:$0x1]
      %v705 = vld [vmem:[#allocation2 + $0x4] sm:$0xe]
      %v706 = vld [vmem:[#allocation2 + $0xc] sm:$0x3]
      %v707 = vld [vmem:[#allocation2 + $0x4] sm:$0xc]
      %v708 = vld [vmem:[#allocation2 + $0xc] sm:$0x7]
      %v709 = vld [vmem:[#allocation2 + $0x4] sm:$0x8]
      %v710 = vld [vmem:[#allocation2 + $0xc] sm:$0xf]
      %v711 = vpack.c.b16 %v632, %v540
      %v713 = vunpack.c.l.b16 %v704
      %v714 = vpack.c.b16 %v713, %v713
      %v716 = vshrl.u32 %v711, 16
      %v718 = vshll.u32 %v711, 16
      %v720 = vrot.slane %v718, 1
      %v721 = vor.u32 %v716, %v720
      %v723 = vshll.u32 %v714, 16
      %v725 = vrot.slane %v723, 1
      %v726 = vsel %vm545, %v721, %v725
      %727 = vrot.lane.b32.xlu0 %v726, 32
      %v728 = vpop.permute.xlu0 %727
      %v730 = vunpack.c.l.b16 %v705
      %v731 = vpack.c.b16 %v632, %v730
      %v732 = vrot.slane %v731, 1
      %v733 = vrot.slane %v714, 1
      %v734 = vsel %vm563, %v732, %v733
      %735 = vrot.lane.b32.xlu0 %v734, 64
      %v736 = vpop.permute.xlu0 %735
      %v738 = vunpack.c.l.b16 %v706
      %v739 = vpack.c.b16 %v738, %v738
      %v741 = vshrl.u32 %v731, 16
      %v743 = vrot.slane %v741, 1
      %v744 = vshll.u32 %v731, 16
      %v746 = vrot.slane %v744, 2
      %v747 = vor.u32 %v743, %v746
      %v749 = vshrl.u32 %v739, 16
      %v751 = vrot.slane %v749, 1
      %v752 = vshll.u32 %v739, 16
      %v754 = vrot.slane %v752, 2
      %v755 = vor.u32 %v751, %v754
      %v756 = vsel %vm572, %v747, %v755
      %757 = vrot.lane.b32.xlu0 %v756, 96
      %v758 = vpop.permute.xlu0 %757
      %v760 = vunpack.c.l.b16 %v707
      %v761 = vpack.c.b16 %v632, %v760
      %v762 = vrot.slane %v761, 2
      %v763 = vrot.slane %v739, 2
      %v764 = vsel %vm595, %v762, %v763
      %v766 = vunpack.c.l.b16 %v708
      %v767 = vpack.c.b16 %v766, %v766
      %v769 = vshrl.u32 %v761, 16
      %v771 = vrot.slane %v769, 2
      %v772 = vshll.u32 %v761, 16
      %v774 = vrot.slane %v772, 3
      %v775 = vor.u32 %v771, %v774
      %v777 = vshrl.u32 %v767, 16
      %v779 = vrot.slane %v777, 2
      %v780 = vshll.u32 %v767, 16
      %v782 = vrot.slane %v780, 3
      %v783 = vor.u32 %v779, %v782
      %v784 = vsel %vm602, %v775, %v783
      %785 = vrot.lane.b32.xlu0 %v784, 32
      %v786 = vpop.permute.xlu0 %785
      %v788 = vunpack.c.l.b16 %v709
      %v789 = vpack.c.b16 %v632, %v788
      %v790 = vrot.slane %v789, 3
      %v791 = vrot.slane %v767, 3
      %v792 = vsel %vm625, %v790, %v791
      %793 = vrot.lane.b32.xlu0 %v792, 64
      %v794 = vpop.permute.xlu0 %793
      %v796 = vunpack.c.l.b16 %v710
      %v797 = vpack.c.b16 %v796, %v796
      %v799 = vshrl.u32 %v789, 16
      %v801 = vrot.slane %v799, 3
      %v802 = vshll.u32 %v789, 16
      %v804 = vrot.slane %v802, 4
      %v805 = vor.u32 %v801, %v804
      %v807 = vshrl.u32 %v797, 16
      %v809 = vrot.slane %v807, 3
      %v810 = vshll.u32 %v797, 16
      %v812 = vrot.slane %v810, 4
      %v813 = vor.u32 %v809, %v812
      %v814 = vsel %vm634, %v805, %v813
      %815 = vrot.lane.b32.xlu0 %v814, 96
      %v816 = vpop.permute.xlu0 %815
      %v818 = vsel %vm654, %v711, %v728
      %v820 = vsel %vm657, %v818, %v736
      %v822 = vsel %vm660, %v820, %v758
      %v826 = vsel %vm654, %v764, %v786
      %v828 = vsel %vm657, %v826, %v794
      %v830 = vsel %vm660, %v828, %v816
      %v832 = vld [vmem:[%s3 + $0x80] sm:$0xf]
      %v833 = vld [vmem:[%s3 + $0x84] sm:$0xf]
      %v834 = vld [vmem:[%s3 + $0x88] sm:$0xf]
      %v835 = vld [vmem:[%s3 + $0x8c] sm:$0xf]
      %v836 = vld [vmem:[%s3 + $0x90] sm:$0xf]
      %v837 = vld [vmem:[%s3 + $0x94] sm:$0xf]
      %v838 = vld [vmem:[%s3 + $0x98] sm:$0xf]
      %v839 = vld [vmem:[%s3 + $0x9c] sm:$0xf]
      %v840 = vld [vmem:[%s3 + $0xa0] sm:$0xf]
      %v841 = vld [vmem:[%s3 + $0xa4] sm:$0xf]
      %v842 = vld [vmem:[%s3 + $0xa8] sm:$0xf]
      %v843 = vld [vmem:[%s3 + $0xac] sm:$0xf]
      %v844 = vld [vmem:[%s3 + $0xb0] sm:$0xf]
      %v845 = vld [vmem:[%s3 + $0xb4] sm:$0xf]
      %v846 = vld [vmem:[%s3 + $0xb8] sm:$0xf]
      %v847 = vld [vmem:[%s3 + $0xbc] sm:$0xf]
      %v848 = vld [vmem:[%s3 + $0xc0] sm:$0xf]
      %v849 = vld [vmem:[%s3 + $0xc4] sm:$0xf]
      %v850 = vld [vmem:[%s3 + $0xc8] sm:$0xf]
      %v851 = vld [vmem:[%s3 + $0xcc] sm:$0xf]
      %v852 = vld [vmem:[%s3 + $0xd0] sm:$0xf]
      %v853 = vld [vmem:[%s3 + $0xd4] sm:$0xf]
      %v854 = vld [vmem:[%s3 + $0xd8] sm:$0xf]
      %v855 = vld [vmem:[%s3 + $0xdc] sm:$0xf]
      %v856 = vld [vmem:[%s3 + $0xe0] sm:$0xf]
      %v857 = vld [vmem:[%s3 + $0xe4] sm:$0xf]
      %v858 = vld [vmem:[%s3 + $0xe8] sm:$0xf]
      %v859 = vld [vmem:[%s3 + $0xec] sm:$0xf]
      %v860 = vld [vmem:[%s3 + $0xf0] sm:$0xf]
      %v861 = vld [vmem:[%s3 + $0xf4] sm:$0xf]
      %v862 = vld [vmem:[%s3 + $0xf8] sm:$0xf]
      %v863 = vld [vmem:[%s3 + $0xfc] sm:$0xf]
      %v896 = vunpack.c.l.b16 %v832
      %v897 = vunpack.c.l.b16 %v833
      %v898 = vunpack.c.l.b16 %v834
      %v899 = vunpack.c.l.b16 %v835
      %v900 = vunpack.c.l.b16 %v836
      %v901 = vunpack.c.l.b16 %v837
      %v902 = vunpack.c.l.b16 %v838
      %v903 = vunpack.c.l.b16 %v839
      %v904 = vunpack.c.l.b16 %v840
      %v905 = vunpack.c.l.b16 %v841
      %v906 = vunpack.c.l.b16 %v842
      %v907 = vunpack.c.l.b16 %v843
      %v908 = vunpack.c.l.b16 %v844
      %v909 = vunpack.c.l.b16 %v845
      %v910 = vunpack.c.l.b16 %v846
      %v911 = vunpack.c.l.b16 %v847
      %v912 = vunpack.c.l.b16 %v848
      %v913 = vunpack.c.l.b16 %v849
      %v914 = vunpack.c.l.b16 %v850
      %v915 = vunpack.c.l.b16 %v851
      %v916 = vunpack.c.l.b16 %v852
      %v917 = vunpack.c.l.b16 %v853
      %v918 = vunpack.c.l.b16 %v854
      %v919 = vunpack.c.l.b16 %v855
      %v920 = vunpack.c.l.b16 %v856
      %v921 = vunpack.c.l.b16 %v857
      %v922 = vunpack.c.l.b16 %v858
      %v923 = vunpack.c.l.b16 %v859
      %v924 = vunpack.c.l.b16 %v860
      %v925 = vunpack.c.l.b16 %v861
      %v926 = vunpack.c.l.b16 %v862
      %v927 = vunpack.c.l.b16 %v863
      %v928 = vpack.c.b16 %v897, %v896
      %v929 = vpack.c.b16 %v899, %v898
      %v930 = vpack.c.b16 %v901, %v900
      %v931 = vpack.c.b16 %v903, %v902
      %v932 = vpack.c.b16 %v905, %v904
      %v933 = vpack.c.b16 %v907, %v906
      %v934 = vpack.c.b16 %v909, %v908
      %v935 = vpack.c.b16 %v911, %v910
      %v936 = vpack.c.b16 %v913, %v912
      %v937 = vpack.c.b16 %v915, %v914
      %v938 = vpack.c.b16 %v917, %v916
      %v939 = vpack.c.b16 %v919, %v918
      %v940 = vpack.c.b16 %v921, %v920
      %v941 = vpack.c.b16 %v923, %v922
      %v942 = vpack.c.b16 %v925, %v924
      %v943 = vpack.c.b16 %v927, %v926
      %960 = vmatprep.subr.bf16.mxu0 0
      %961 = vmatpush1.bf16.msra.mxu0 %v935
      %962 = vmatprep.subr.bf16.mxu0 0
      %963 = vmatpush1.bf16.msra.mxu0 %v934
      %964 = vmatprep.subr.bf16.mxu0 0
      %965 = vmatpush1.bf16.msra.mxu0 %v933
      %966 = vmatprep.subr.bf16.mxu0 0
      %967 = vmatpush1.bf16.msra.mxu0 %v932
      %968 = vmatprep.subr.bf16.mxu0 0
      %969 = vmatpush1.bf16.msra.mxu0 %v931
      %970 = vmatprep.subr.bf16.mxu0 0
      %971 = vmatpush1.bf16.msra.mxu0 %v930
      %972 = vmatprep.subr.bf16.mxu0 0
      %973 = vmatpush1.bf16.msra.mxu0 %v929
      %974 = vmatprep.subr.bf16.mxu0 0
      %975 = vmatpush1.bf16.msra.mxu0 %v928
      %976 = vmatprep.subr.bf16.mxu0 0
      %977 = vmatpush2.bf16.msra.mxu0 %v943
      %978 = vmatprep.subr.bf16.mxu0 0
      %979 = vmatpush2.bf16.msra.mxu0 %v942
      %980 = vmatprep.subr.bf16.mxu0 0
      %981 = vmatpush2.bf16.msra.mxu0 %v941
      %982 = vmatprep.subr.bf16.mxu0 0
      %983 = vmatpush2.bf16.msra.mxu0 %v940
      %984 = vmatprep.subr.bf16.mxu0 0
      %985 = vmatpush2.bf16.msra.mxu0 %v939
      %986 = vmatprep.subr.bf16.mxu0 0
      %987 = vmatpush2.bf16.msra.mxu0 %v938
      %988 = vmatprep.subr.bf16.mxu0 0
      %989 = vmatpush2.bf16.msra.mxu0 %v937
      %990 = vmatprep.subr.bf16.mxu0 0
      %991 = vmatpush2.bf16.msra.mxu0 %v936
      %992 = vmatprep.mubr.bf16.mxu0 %v830
      %993 = vmatmul.mubr.bf16.gmra.mxu0 %v822
      %v994 = vpop.f32.mrf.mxu0
      %v995 = vadd.f32 0.0, %v994
      %v996 = vpop.f32.mrf.mxu0
      %v997 = vpop.f32.mrf.mxu0
      %v998 = vadd.f32 0.0, %v997
      %v999 = vpop.f32.mrf.mxu0
      %1000 = vdwg.mxu0
      %v1033 = vunpack.c.l.b16 %v672
      %v1034 = vunpack.c.l.b16 %v673
      %v1035 = vunpack.c.l.b16 %v674
      %v1036 = vunpack.c.l.b16 %v675
      %v1037 = vunpack.c.l.b16 %v676
      %v1038 = vunpack.c.l.b16 %v677
      %v1039 = vunpack.c.l.b16 %v678
      %v1040 = vunpack.c.l.b16 %v679
      %v1041 = vunpack.c.l.b16 %v680
      %v1042 = vunpack.c.l.b16 %v681
      %v1043 = vunpack.c.l.b16 %v682
      %v1044 = vunpack.c.l.b16 %v683
      %v1045 = vunpack.c.l.b16 %v684
      %v1046 = vunpack.c.l.b16 %v685
      %v1047 = vunpack.c.l.b16 %v686
      %v1048 = vunpack.c.l.b16 %v687
      %v1049 = vunpack.c.l.b16 %v688
      %v1050 = vunpack.c.l.b16 %v689
      %v1051 = vunpack.c.l.b16 %v690
      %v1052 = vunpack.c.l.b16 %v691
      %v1053 = vunpack.c.l.b16 %v692
      %v1054 = vunpack.c.l.b16 %v693
      %v1055 = vunpack.c.l.b16 %v694
      %v1056 = vunpack.c.l.b16 %v695
      %v1057 = vunpack.c.l.b16 %v696
      %v1058 = vunpack.c.l.b16 %v697
      %v1059 = vunpack.c.l.b16 %v698
      %v1060 = vunpack.c.l.b16 %v699
      %v1061 = vunpack.c.l.b16 %v700
      %v1062 = vunpack.c.l.b16 %v701
      %v1063 = vunpack.c.l.b16 %v702
      %v1064 = vunpack.c.l.b16 %v703
      %v1065 = vpack.c.b16 %v1034, %v1033
      %v1066 = vpack.c.b16 %v1036, %v1035
      %v1067 = vpack.c.b16 %v1038, %v1037
      %v1068 = vpack.c.b16 %v1040, %v1039
      %v1069 = vpack.c.b16 %v1042, %v1041
      %v1070 = vpack.c.b16 %v1044, %v1043
      %v1071 = vpack.c.b16 %v1046, %v1045
      %v1072 = vpack.c.b16 %v1048, %v1047
      %v1073 = vpack.c.b16 %v1050, %v1049
      %v1074 = vpack.c.b16 %v1052, %v1051
      %v1075 = vpack.c.b16 %v1054, %v1053
      %v1076 = vpack.c.b16 %v1056, %v1055
      %v1077 = vpack.c.b16 %v1058, %v1057
      %v1078 = vpack.c.b16 %v1060, %v1059
      %v1079 = vpack.c.b16 %v1062, %v1061
      %v1080 = vpack.c.b16 %v1064, %v1063
      %1097 = vmatprep.subr.bf16.mxu0 0
      %1098 = vmatpush1.bf16.msra.mxu0 %v1072
      %1099 = vmatprep.subr.bf16.mxu0 0
      %1100 = vmatpush1.bf16.msra.mxu0 %v1071
      %1101 = vmatprep.subr.bf16.mxu0 0
      %1102 = vmatpush1.bf16.msra.mxu0 %v1070
      %1103 = vmatprep.subr.bf16.mxu0 0
      %1104 = vmatpush1.bf16.msra.mxu0 %v1069
      %1105 = vmatprep.subr.bf16.mxu0 0
      %1106 = vmatpush1.bf16.msra.mxu0 %v1068
      %1107 = vmatprep.subr.bf16.mxu0 0
      %1108 = vmatpush1.bf16.msra.mxu0 %v1067
      %1109 = vmatprep.subr.bf16.mxu0 0
      %1110 = vmatpush1.bf16.msra.mxu0 %v1066
      %1111 = vmatprep.subr.bf16.mxu0 0
      %1112 = vmatpush1.bf16.msra.mxu0 %v1065
      %1113 = vmatprep.subr.bf16.mxu0 0
      %1114 = vmatpush2.bf16.msra.mxu0 %v1080
      %1115 = vmatprep.subr.bf16.mxu0 0
      %1116 = vmatpush2.bf16.msra.mxu0 %v1079
      %1117 = vmatprep.subr.bf16.mxu0 0
      %1118 = vmatpush2.bf16.msra.mxu0 %v1078
      %1119 = vmatprep.subr.bf16.mxu0 0
      %1120 = vmatpush2.bf16.msra.mxu0 %v1077
      %1121 = vmatprep.subr.bf16.mxu0 0
      %1122 = vmatpush2.bf16.msra.mxu0 %v1076
      %1123 = vmatprep.subr.bf16.mxu0 0
      %1124 = vmatpush2.bf16.msra.mxu0 %v1075
      %1125 = vmatprep.subr.bf16.mxu0 0
      %1126 = vmatpush2.bf16.msra.mxu0 %v1074
      %1127 = vmatprep.subr.bf16.mxu0 0
      %1128 = vmatpush2.bf16.msra.mxu0 %v1073
      %1129 = vmatprep.mubr.bf16.mxu0 %v670
      %1130 = vmatmul.mubr.bf16.gmra.mxu0 %v662
      %v1131 = vpop.f32.mrf.mxu0
      %v1132 = vadd.f32 %v995, %v1131
      %v1133 = vpop.f32.mrf.mxu0
      %v1134 = vpop.f32.mrf.mxu0
      %v1135 = vadd.f32 %v998, %v1134
      %v1136 = vpop.f32.mrf.mxu0
      %1137 = vdwg.mxu0
      %v1138 = vld [vmem:[#allocation2 + $0x8] sm:$0xf]
      %v1139 = vld [vmem:[#allocation2 + $0xc] sm:$0xf]
      %v1140 = vld [vmem:[#allocation2 + $0x10] sm:$0x1]
      %v1141 = vld [vmem:[#allocation2 + $0x8] sm:$0xe]
      %v1142 = vld [vmem:[#allocation2 + $0x10] sm:$0x3]
      %v1143 = vld [vmem:[#allocation2 + $0x8] sm:$0xc]
      %v1144 = vld [vmem:[#allocation2 + $0x10] sm:$0x7]
      %v1145 = vld [vmem:[#allocation2 + $0x8] sm:$0x8]
      %v1146 = vld [vmem:[#allocation2 + $0x10] sm:$0xf]
      %v1147 = vpack.c.b16 %v796, %v632
      %v1151 = vunpack.c.l.b16 %v1138
      %v1152 = vunpack.c.l.b16 %v1139
      %v1153 = vunpack.c.l.b16 %v1140
      %v1154 = vpack.c.b16 %v1152, %v1151
      %v1155 = vpack.c.b16 %v1153, %v1153
      %v1157 = vshrl.u32 %v1154, 16
      %v1159 = vshll.u32 %v1154, 16
      %v1161 = vrot.slane %v1159, 1
      %v1162 = vor.u32 %v1157, %v1161
      %v1164 = vshll.u32 %v1155, 16
      %v1166 = vrot.slane %v1164, 1
      %v1167 = vsel %vm545, %v1162, %v1166
      %1168 = vrot.lane.b32.xlu0 %v1167, 32
      %v1169 = vpop.permute.xlu0 %1168
      %v1171 = vunpack.c.l.b16 %v1141
      %v1172 = vpack.c.b16 %v1152, %v1171
      %v1173 = vrot.slane %v1172, 1
      %v1174 = vrot.slane %v1155, 1
      %v1175 = vsel %vm563, %v1173, %v1174
      %1176 = vrot.lane.b32.xlu0 %v1175, 64
      %v1177 = vpop.permute.xlu0 %1176
      %v1179 = vunpack.c.l.b16 %v1142
      %v1180 = vpack.c.b16 %v1179, %v1179
      %v1182 = vshrl.u32 %v1172, 16
      %v1184 = vrot.slane %v1182, 1
      %v1185 = vshll.u32 %v1172, 16
      %v1187 = vrot.slane %v1185, 2
      %v1188 = vor.u32 %v1184, %v1187
      %v1190 = vshrl.u32 %v1180, 16
      %v1192 = vrot.slane %v1190, 1
      %v1193 = vshll.u32 %v1180, 16
      %v1195 = vrot.slane %v1193, 2
      %v1196 = vor.u32 %v1192, %v1195
      %v1197 = vsel %vm572, %v1188, %v1196
      %1198 = vrot.lane.b32.xlu0 %v1197, 96
      %v1199 = vpop.permute.xlu0 %1198
      %v1201 = vunpack.c.l.b16 %v1143
      %v1202 = vpack.c.b16 %v1152, %v1201
      %v1203 = vrot.slane %v1202, 2
      %v1204 = vrot.slane %v1180, 2
      %v1205 = vsel %vm595, %v1203, %v1204
      %v1207 = vunpack.c.l.b16 %v1144
      %v1208 = vpack.c.b16 %v1207, %v1207
      %v1210 = vshrl.u32 %v1202, 16
      %v1212 = vrot.slane %v1210, 2
      %v1213 = vshll.u32 %v1202, 16
      %v1215 = vrot.slane %v1213, 3
      %v1216 = vor.u32 %v1212, %v1215
      %v1218 = vshrl.u32 %v1208, 16
      %v1220 = vrot.slane %v1218, 2
      %v1221 = vshll.u32 %v1208, 16
      %v1223 = vrot.slane %v1221, 3
      %v1224 = vor.u32 %v1220, %v1223
      %v1225 = vsel %vm602, %v1216, %v1224
      %1226 = vrot.lane.b32.xlu0 %v1225, 32
      %v1227 = vpop.permute.xlu0 %1226
      %v1229 = vunpack.c.l.b16 %v1145
      %v1230 = vpack.c.b16 %v1152, %v1229
      %v1231 = vrot.slane %v1230, 3
      %v1232 = vrot.slane %v1208, 3
      %v1233 = vsel %vm625, %v1231, %v1232
      %1234 = vrot.lane.b32.xlu0 %v1233, 64
      %v1235 = vpop.permute.xlu0 %1234
      %v1237 = vunpack.c.l.b16 %v1146
      %v1238 = vpack.c.b16 %v1237, %v1237
      %v1240 = vshrl.u32 %v1230, 16
      %v1242 = vrot.slane %v1240, 3
      %v1243 = vshll.u32 %v1230, 16
      %v1245 = vrot.slane %v1243, 4
      %v1246 = vor.u32 %v1242, %v1245
      %v1248 = vshrl.u32 %v1238, 16
      %v1250 = vrot.slane %v1248, 3
      %v1251 = vshll.u32 %v1238, 16
      %v1253 = vrot.slane %v1251, 4
      %v1254 = vor.u32 %v1250, %v1253
      %v1255 = vsel %vm634, %v1246, %v1254
      %1256 = vrot.lane.b32.xlu0 %v1255, 96
      %v1257 = vpop.permute.xlu0 %1256
      %v1260 = vsel %vm654, %v1147, %v1169
      %v1262 = vsel %vm657, %v1260, %v1177
      %v1264 = vsel %vm660, %v1262, %v1199
      %v1268 = vsel %vm654, %v1205, %v1227
      %v1270 = vsel %vm657, %v1268, %v1235
      %v1272 = vsel %vm660, %v1270, %v1257
      %v1274 = vld [vmem:[%s3 + $0x100] sm:$0xf]
      %v1275 = vld [vmem:[%s3 + $0x104] sm:$0xf]
      %v1276 = vld [vmem:[%s3 + $0x108] sm:$0xf]
      %v1277 = vld [vmem:[%s3 + $0x10c] sm:$0xf]
      %v1278 = vld [vmem:[%s3 + $0x110] sm:$0xf]
      %v1279 = vld [vmem:[%s3 + $0x114] sm:$0xf]
      %v1280 = vld [vmem:[%s3 + $0x118] sm:$0xf]
      %v1281 = vld [vmem:[%s3 + $0x11c] sm:$0xf]
      %v1282 = vld [vmem:[%s3 + $0x120] sm:$0xf]
      %v1283 = vld [vmem:[%s3 + $0x124] sm:$0xf]
      %v1284 = vld [vmem:[%s3 + $0x128] sm:$0xf]
      %v1285 = vld [vmem:[%s3 + $0x12c] sm:$0xf]
      %v1286 = vld [vmem:[%s3 + $0x130] sm:$0xf]
      %v1287 = vld [vmem:[%s3 + $0x134] sm:$0xf]
      %v1288 = vld [vmem:[%s3 + $0x138] sm:$0xf]
      %v1289 = vld [vmem:[%s3 + $0x13c] sm:$0xf]
      %v1290 = vld [vmem:[%s3 + $0x140] sm:$0xf]
      %v1291 = vld [vmem:[%s3 + $0x144] sm:$0xf]
      %v1292 = vld [vmem:[%s3 + $0x148] sm:$0xf]
      %v1293 = vld [vmem:[%s3 + $0x14c] sm:$0xf]
      %v1294 = vld [vmem:[%s3 + $0x150] sm:$0xf]
      %v1295 = vld [vmem:[%s3 + $0x154] sm:$0xf]
      %v1296 = vld [vmem:[%s3 + $0x158] sm:$0xf]
      %v1297 = vld [vmem:[%s3 + $0x15c] sm:$0xf]
      %v1298 = vld [vmem:[%s3 + $0x160] sm:$0xf]
      %v1299 = vld [vmem:[%s3 + $0x164] sm:$0xf]
      %v1300 = vld [vmem:[%s3 + $0x168] sm:$0xf]
      %v1301 = vld [vmem:[%s3 + $0x16c] sm:$0xf]
      %v1302 = vld [vmem:[%s3 + $0x170] sm:$0xf]
      %v1303 = vld [vmem:[%s3 + $0x174] sm:$0xf]
      %v1304 = vld [vmem:[%s3 + $0x178] sm:$0xf]
      %v1305 = vld [vmem:[%s3 + $0x17c] sm:$0xf]
      %v1338 = vunpack.c.l.b16 %v1274
      %v1339 = vunpack.c.l.b16 %v1275
      %v1340 = vunpack.c.l.b16 %v1276
      %v1341 = vunpack.c.l.b16 %v1277
      %v1342 = vunpack.c.l.b16 %v1278
      %v1343 = vunpack.c.l.b16 %v1279
      %v1344 = vunpack.c.l.b16 %v1280
      %v1345 = vunpack.c.l.b16 %v1281
      %v1346 = vunpack.c.l.b16 %v1282
      %v1347 = vunpack.c.l.b16 %v1283
      %v1348 = vunpack.c.l.b16 %v1284
      %v1349 = vunpack.c.l.b16 %v1285
      %v1350 = vunpack.c.l.b16 %v1286
      %v1351 = vunpack.c.l.b16 %v1287
      %v1352 = vunpack.c.l.b16 %v1288
      %v1353 = vunpack.c.l.b16 %v1289
      %v1354 = vunpack.c.l.b16 %v1290
      %v1355 = vunpack.c.l.b16 %v1291
      %v1356 = vunpack.c.l.b16 %v1292
      %v1357 = vunpack.c.l.b16 %v1293
      %v1358 = vunpack.c.l.b16 %v1294
      %v1359 = vunpack.c.l.b16 %v1295
      %v1360 = vunpack.c.l.b16 %v1296
      %v1361 = vunpack.c.l.b16 %v1297
      %v1362 = vunpack.c.l.b16 %v1298
      %v1363 = vunpack.c.l.b16 %v1299
      %v1364 = vunpack.c.l.b16 %v1300
      %v1365 = vunpack.c.l.b16 %v1301
      %v1366 = vunpack.c.l.b16 %v1302
      %v1367 = vunpack.c.l.b16 %v1303
      %v1368 = vunpack.c.l.b16 %v1304
      %v1369 = vunpack.c.l.b16 %v1305
      %v1370 = vpack.c.b16 %v1339, %v1338
      %v1371 = vpack.c.b16 %v1341, %v1340
      %v1372 = vpack.c.b16 %v1343, %v1342
      %v1373 = vpack.c.b16 %v1345, %v1344
      %v1374 = vpack.c.b16 %v1347, %v1346
      %v1375 = vpack.c.b16 %v1349, %v1348
      %v1376 = vpack.c.b16 %v1351, %v1350
      %v1377 = vpack.c.b16 %v1353, %v1352
      %v1378 = vpack.c.b16 %v1355, %v1354
      %v1379 = vpack.c.b16 %v1357, %v1356
      %v1380 = vpack.c.b16 %v1359, %v1358
      %v1381 = vpack.c.b16 %v1361, %v1360
      %v1382 = vpack.c.b16 %v1363, %v1362
      %v1383 = vpack.c.b16 %v1365, %v1364
      %v1384 = vpack.c.b16 %v1367, %v1366
      %v1385 = vpack.c.b16 %v1369, %v1368
      %1402 = vmatprep.subr.bf16.mxu0 0
      %1403 = vmatpush1.bf16.msra.mxu0 %v1377
      %1404 = vmatprep.subr.bf16.mxu0 0
      %1405 = vmatpush1.bf16.msra.mxu0 %v1376
      %1406 = vmatprep.subr.bf16.mxu0 0
      %1407 = vmatpush1.bf16.msra.mxu0 %v1375
      %1408 = vmatprep.subr.bf16.mxu0 0
      %1409 = vmatpush1.bf16.msra.mxu0 %v1374
      %1410 = vmatprep.subr.bf16.mxu0 0
      %1411 = vmatpush1.bf16.msra.mxu0 %v1373
      %1412 = vmatprep.subr.bf16.mxu0 0
      %1413 = vmatpush1.bf16.msra.mxu0 %v1372
      %1414 = vmatprep.subr.bf16.mxu0 0
      %1415 = vmatpush1.bf16.msra.mxu0 %v1371
      %1416 = vmatprep.subr.bf16.mxu0 0
      %1417 = vmatpush1.bf16.msra.mxu0 %v1370
      %1418 = vmatprep.subr.bf16.mxu0 0
      %1419 = vmatpush2.bf16.msra.mxu0 %v1385
      %1420 = vmatprep.subr.bf16.mxu0 0
      %1421 = vmatpush2.bf16.msra.mxu0 %v1384
      %1422 = vmatprep.subr.bf16.mxu0 0
      %1423 = vmatpush2.bf16.msra.mxu0 %v1383
      %1424 = vmatprep.subr.bf16.mxu0 0
      %1425 = vmatpush2.bf16.msra.mxu0 %v1382
      %1426 = vmatprep.subr.bf16.mxu0 0
      %1427 = vmatpush2.bf16.msra.mxu0 %v1381
      %1428 = vmatprep.subr.bf16.mxu0 0
      %1429 = vmatpush2.bf16.msra.mxu0 %v1380
      %1430 = vmatprep.subr.bf16.mxu0 0
      %1431 = vmatpush2.bf16.msra.mxu0 %v1379
      %1432 = vmatprep.subr.bf16.mxu0 0
      %1433 = vmatpush2.bf16.msra.mxu0 %v1378
      %1434 = vmatprep.mubr.bf16.mxu0 %v1272
      %1435 = vmatmul.mubr.bf16.gmra.mxu0 %v1264
      %v1436 = vpop.f32.mrf.mxu0
      %v1437 = vadd.f32 0.0, %v1436
      %v1438 = vpop.f32.mrf.mxu0
      %v1439 = vpop.f32.mrf.mxu0
      %v1440 = vadd.f32 0.0, %v1439
      %v1441 = vpop.f32.mrf.mxu0
      %1442 = vdwg.mxu0
      %v1443 = vadd.f32 %v1132, %v1437
      %v1444 = vadd.f32 %v1135, %v1440
      %v1445 = vld [vmem:[#allocation2 + $0xc] sm:$0xf]
      %v1446 = vld [vmem:[#allocation2 + $0x10] sm:$0xf]
      %v1447 = vld [vmem:[#allocation2 + $0x14] sm:$0x1]
      %v1448 = vld [vmem:[#allocation2 + $0xc] sm:$0xe]
      %v1449 = vld [vmem:[#allocation2 + $0x14] sm:$0x3]
      %v1450 = vld [vmem:[#allocation2 + $0xc] sm:$0xc]
      %v1451 = vld [vmem:[#allocation2 + $0x14] sm:$0x7]
      %v1452 = vld [vmem:[#allocation2 + $0xc] sm:$0x8]
      %v1453 = vld [vmem:[#allocation2 + $0x14] sm:$0xf]
      %v1454 = vpack.c.b16 %v1237, %v1152
      %v1458 = vunpack.c.l.b16 %v1445
      %v1459 = vunpack.c.l.b16 %v1446
      %v1460 = vunpack.c.l.b16 %v1447
      %v1461 = vpack.c.b16 %v1459, %v1458
      %v1462 = vpack.c.b16 %v1460, %v1460
      %v1464 = vshrl.u32 %v1461, 16
      %v1466 = vshll.u32 %v1461, 16
      %v1468 = vrot.slane %v1466, 1
      %v1469 = vor.u32 %v1464, %v1468
      %v1471 = vshll.u32 %v1462, 16
      %v1473 = vrot.slane %v1471, 1
      %v1474 = vsel %vm545, %v1469, %v1473
      %1475 = vrot.lane.b32.xlu0 %v1474, 32
      %v1476 = vpop.permute.xlu0 %1475
      %v1478 = vunpack.c.l.b16 %v1448
      %v1479 = vpack.c.b16 %v1459, %v1478
      %v1480 = vrot.slane %v1479, 1
      %v1481 = vrot.slane %v1462, 1
      %v1482 = vsel %vm563, %v1480, %v1481
      %1483 = vrot.lane.b32.xlu0 %v1482, 64
      %v1484 = vpop.permute.xlu0 %1483
      %v1486 = vunpack.c.l.b16 %v1449
      %v1487 = vpack.c.b16 %v1486, %v1486
      %v1489 = vshrl.u32 %v1479, 16
      %v1491 = vrot.slane %v1489, 1
      %v1492 = vshll.u32 %v1479, 16
      %v1494 = vrot.slane %v1492, 2
      %v1495 = vor.u32 %v1491, %v1494
      %v1497 = vshrl.u32 %v1487, 16
      %v1499 = vrot.slane %v1497, 1
      %v1500 = vshll.u32 %v1487, 16
      %v1502 = vrot.slane %v1500, 2
      %v1503 = vor.u32 %v1499, %v1502
      %v1504 = vsel %vm572, %v1495, %v1503
      %1505 = vrot.lane.b32.xlu0 %v1504, 96
      %v1506 = vpop.permute.xlu0 %1505
      %v1508 = vunpack.c.l.b16 %v1450
      %v1509 = vpack.c.b16 %v1459, %v1508
      %v1510 = vrot.slane %v1509, 2
      %v1511 = vrot.slane %v1487, 2
      %v1512 = vsel %vm595, %v1510, %v1511
      %v1514 = vunpack.c.l.b16 %v1451
      %v1515 = vpack.c.b16 %v1514, %v1514
      %v1517 = vshrl.u32 %v1509, 16
      %v1519 = vrot.slane %v1517, 2
      %v1520 = vshll.u32 %v1509, 16
      %v1522 = vrot.slane %v1520, 3
      %v1523 = vor.u32 %v1519, %v1522
      %v1525 = vshrl.u32 %v1515, 16
      %v1527 = vrot.slane %v1525, 2
      %v1528 = vshll.u32 %v1515, 16
      %v1530 = vrot.slane %v1528, 3
      %v1531 = vor.u32 %v1527, %v1530
      %v1532 = vsel %vm602, %v1523, %v1531
      %1533 = vrot.lane.b32.xlu0 %v1532, 32
      %v1534 = vpop.permute.xlu0 %1533
      %v1536 = vunpack.c.l.b16 %v1452
      %v1537 = vpack.c.b16 %v1459, %v1536
      %v1538 = vrot.slane %v1537, 3
      %v1539 = vrot.slane %v1515, 3
      %v1540 = vsel %vm625, %v1538, %v1539
      %1541 = vrot.lane.b32.xlu0 %v1540, 64
      %v1542 = vpop.permute.xlu0 %1541
      %v1544 = vunpack.c.l.b16 %v1453
      %v1545 = vpack.c.b16 %v1544, %v1544
      %v1547 = vshrl.u32 %v1537, 16
      %v1549 = vrot.slane %v1547, 3
      %v1550 = vshll.u32 %v1537, 16
      %v1552 = vrot.slane %v1550, 4
      %v1553 = vor.u32 %v1549, %v1552
      %v1555 = vshrl.u32 %v1545, 16
      %v1557 = vrot.slane %v1555, 3
      %v1558 = vshll.u32 %v1545, 16
      %v1560 = vrot.slane %v1558, 4
      %v1561 = vor.u32 %v1557, %v1560
      %v1562 = vsel %vm634, %v1553, %v1561
      %1563 = vrot.lane.b32.xlu0 %v1562, 96
      %v1564 = vpop.permute.xlu0 %1563
      %v1567 = vsel %vm654, %v1454, %v1476
      %v1569 = vsel %vm657, %v1567, %v1484
      %v1571 = vsel %vm660, %v1569, %v1506
      %v1575 = vsel %vm654, %v1512, %v1534
      %v1577 = vsel %vm657, %v1575, %v1542
      %v1579 = vsel %vm660, %v1577, %v1564
      %v1581 = vld [vmem:[%s3 + $0x180] sm:$0xf]
      %v1582 = vld [vmem:[%s3 + $0x184] sm:$0xf]
      %v1583 = vld [vmem:[%s3 + $0x188] sm:$0xf]
      %v1584 = vld [vmem:[%s3 + $0x18c] sm:$0xf]
      %v1585 = vld [vmem:[%s3 + $0x190] sm:$0xf]
      %v1586 = vld [vmem:[%s3 + $0x194] sm:$0xf]
      %v1587 = vld [vmem:[%s3 + $0x198] sm:$0xf]
      %v1588 = vld [vmem:[%s3 + $0x19c] sm:$0xf]
      %v1589 = vld [vmem:[%s3 + $0x1a0] sm:$0xf]
      %v1590 = vld [vmem:[%s3 + $0x1a4] sm:$0xf]
      %v1591 = vld [vmem:[%s3 + $0x1a8] sm:$0xf]
      %v1592 = vld [vmem:[%s3 + $0x1ac] sm:$0xf]
      %v1593 = vld [vmem:[%s3 + $0x1b0] sm:$0xf]
      %v1594 = vld [vmem:[%s3 + $0x1b4] sm:$0xf]
      %v1595 = vld [vmem:[%s3 + $0x1b8] sm:$0xf]
      %v1596 = vld [vmem:[%s3 + $0x1bc] sm:$0xf]
      %v1597 = vld [vmem:[%s3 + $0x1c0] sm:$0xf]
      %v1598 = vld [vmem:[%s3 + $0x1c4] sm:$0xf]
      %v1599 = vld [vmem:[%s3 + $0x1c8] sm:$0xf]
      %v1600 = vld [vmem:[%s3 + $0x1cc] sm:$0xf]
      %v1601 = vld [vmem:[%s3 + $0x1d0] sm:$0xf]
      %v1602 = vld [vmem:[%s3 + $0x1d4] sm:$0xf]
      %v1603 = vld [vmem:[%s3 + $0x1d8] sm:$0xf]
      %v1604 = vld [vmem:[%s3 + $0x1dc] sm:$0xf]
      %v1605 = vld [vmem:[%s3 + $0x1e0] sm:$0xf]
      %v1606 = vld [vmem:[%s3 + $0x1e4] sm:$0xf]
      %v1607 = vld [vmem:[%s3 + $0x1e8] sm:$0xf]
      %v1608 = vld [vmem:[%s3 + $0x1ec] sm:$0xf]
      %v1609 = vld [vmem:[%s3 + $0x1f0] sm:$0xf]
      %v1610 = vld [vmem:[%s3 + $0x1f4] sm:$0xf]
      %v1611 = vld [vmem:[%s3 + $0x1f8] sm:$0xf]
      %v1612 = vld [vmem:[%s3 + $0x1fc] sm:$0xf]
      %v1645 = vunpack.c.l.b16 %v1581
      %v1646 = vunpack.c.l.b16 %v1582
      %v1647 = vunpack.c.l.b16 %v1583
      %v1648 = vunpack.c.l.b16 %v1584
      %v1649 = vunpack.c.l.b16 %v1585
      %v1650 = vunpack.c.l.b16 %v1586
      %v1651 = vunpack.c.l.b16 %v1587
      %v1652 = vunpack.c.l.b16 %v1588
      %v1653 = vunpack.c.l.b16 %v1589
      %v1654 = vunpack.c.l.b16 %v1590
      %v1655 = vunpack.c.l.b16 %v1591
      %v1656 = vunpack.c.l.b16 %v1592
      %v1657 = vunpack.c.l.b16 %v1593
      %v1658 = vunpack.c.l.b16 %v1594
      %v1659 = vunpack.c.l.b16 %v1595
      %v1660 = vunpack.c.l.b16 %v1596
      %v1661 = vunpack.c.l.b16 %v1597
      %v1662 = vunpack.c.l.b16 %v1598
      %v1663 = vunpack.c.l.b16 %v1599
      %v1664 = vunpack.c.l.b16 %v1600
      %v1665 = vunpack.c.l.b16 %v1601
      %v1666 = vunpack.c.l.b16 %v1602
      %v1667 = vunpack.c.l.b16 %v1603
      %v1668 = vunpack.c.l.b16 %v1604
      %v1669 = vunpack.c.l.b16 %v1605
      %v1670 = vunpack.c.l.b16 %v1606
      %v1671 = vunpack.c.l.b16 %v1607
      %v1672 = vunpack.c.l.b16 %v1608
      %v1673 = vunpack.c.l.b16 %v1609
      %v1674 = vunpack.c.l.b16 %v1610
      %v1675 = vunpack.c.l.b16 %v1611
      %v1676 = vunpack.c.l.b16 %v1612
      %v1677 = vpack.c.b16 %v1646, %v1645
      %v1678 = vpack.c.b16 %v1648, %v1647
      %v1679 = vpack.c.b16 %v1650, %v1649
      %v1680 = vpack.c.b16 %v1652, %v1651
      %v1681 = vpack.c.b16 %v1654, %v1653
      %v1682 = vpack.c.b16 %v1656, %v1655
      %v1683 = vpack.c.b16 %v1658, %v1657
      %v1684 = vpack.c.b16 %v1660, %v1659
      %v1685 = vpack.c.b16 %v1662, %v1661
      %v1686 = vpack.c.b16 %v1664, %v1663
      %v1687 = vpack.c.b16 %v1666, %v1665
      %v1688 = vpack.c.b16 %v1668, %v1667
      %v1689 = vpack.c.b16 %v1670, %v1669
      %v1690 = vpack.c.b16 %v1672, %v1671
      %v1691 = vpack.c.b16 %v1674, %v1673
      %v1692 = vpack.c.b16 %v1676, %v1675
      %1709 = vmatprep.subr.bf16.mxu0 0
      %1710 = vmatpush1.bf16.msra.mxu0 %v1684
      %1711 = vmatprep.subr.bf16.mxu0 0
      %1712 = vmatpush1.bf16.msra.mxu0 %v1683
      %1713 = vmatprep.subr.bf16.mxu0 0
      %1714 = vmatpush1.bf16.msra.mxu0 %v1682
      %1715 = vmatprep.subr.bf16.mxu0 0
      %1716 = vmatpush1.bf16.msra.mxu0 %v1681
      %1717 = vmatprep.subr.bf16.mxu0 0
      %1718 = vmatpush1.bf16.msra.mxu0 %v1680
      %1719 = vmatprep.subr.bf16.mxu0 0
      %1720 = vmatpush1.bf16.msra.mxu0 %v1679
      %1721 = vmatprep.subr.bf16.mxu0 0
      %1722 = vmatpush1.bf16.msra.mxu0 %v1678
      %1723 = vmatprep.subr.bf16.mxu0 0
      %1724 = vmatpush1.bf16.msra.mxu0 %v1677
      %1725 = vmatprep.subr.bf16.mxu0 0
      %1726 = vmatpush2.bf16.msra.mxu0 %v1692
      %1727 = vmatprep.subr.bf16.mxu0 0
      %1728 = vmatpush2.bf16.msra.mxu0 %v1691
      %1729 = vmatprep.subr.bf16.mxu0 0
      %1730 = vmatpush2.bf16.msra.mxu0 %v1690
      %1731 = vmatprep.subr.bf16.mxu0 0
      %1732 = vmatpush2.bf16.msra.mxu0 %v1689
      %1733 = vmatprep.subr.bf16.mxu0 0
      %1734 = vmatpush2.bf16.msra.mxu0 %v1688
      %1735 = vmatprep.subr.bf16.mxu0 0
      %1736 = vmatpush2.bf16.msra.mxu0 %v1687
      %1737 = vmatprep.subr.bf16.mxu0 0
      %1738 = vmatpush2.bf16.msra.mxu0 %v1686
      %1739 = vmatprep.subr.bf16.mxu0 0
      %1740 = vmatpush2.bf16.msra.mxu0 %v1685
      %1741 = vmatprep.mubr.bf16.mxu0 %v1579
      %1742 = vmatmul.mubr.bf16.gmra.mxu0 %v1571
      %v1743 = vpop.f32.mrf.mxu0
      %v1744 = vadd.f32 0.0, %v1743
      %v1745 = vpop.f32.mrf.mxu0
      %v1746 = vpop.f32.mrf.mxu0
      %v1747 = vadd.f32 0.0, %v1746
      %v1748 = vpop.f32.mrf.mxu0
      %1749 = vdwg.mxu0
      %v1750 = vadd.f32 %v1443, %v1744
      %v1751 = vadd.f32 %v1444, %v1747
      %v1752 = vld [vmem:[#allocation2 + $0x10] sm:$0xf]
      %v1753 = vld [vmem:[#allocation2 + $0x14] sm:$0xf]
      %v1754 = vld [vmem:[#allocation2 + $0x18] sm:$0x1]
      %v1755 = vld [vmem:[#allocation2 + $0x10] sm:$0xe]
      %v1756 = vld [vmem:[#allocation2 + $0x18] sm:$0x3]
      %v1757 = vld [vmem:[#allocation2 + $0x10] sm:$0xc]
      %v1758 = vld [vmem:[#allocation2 + $0x18] sm:$0x7]
      %v1759 = vld [vmem:[#allocation2 + $0x10] sm:$0x8]
      %v1760 = vld [vmem:[#allocation2 + $0x18] sm:$0xf]
      %v1761 = vpack.c.b16 %v1544, %v1459
      %v1765 = vunpack.c.l.b16 %v1752
      %v1766 = vunpack.c.l.b16 %v1753
      %v1767 = vunpack.c.l.b16 %v1754
      %v1768 = vpack.c.b16 %v1766, %v1765
      %v1769 = vpack.c.b16 %v1767, %v1767
      %v1771 = vshrl.u32 %v1768, 16
      %v1773 = vshll.u32 %v1768, 16
      %v1775 = vrot.slane %v1773, 1
      %v1776 = vor.u32 %v1771, %v1775
      %v1778 = vshll.u32 %v1769, 16
      %v1780 = vrot.slane %v1778, 1
      %v1781 = vsel %vm545, %v1776, %v1780
      %1782 = vrot.lane.b32.xlu0 %v1781, 32
      %v1783 = vpop.permute.xlu0 %1782
      %v1785 = vunpack.c.l.b16 %v1755
      %v1786 = vpack.c.b16 %v1766, %v1785
      %v1787 = vrot.slane %v1786, 1
      %v1788 = vrot.slane %v1769, 1
      %v1789 = vsel %vm563, %v1787, %v1788
      %1790 = vrot.lane.b32.xlu0 %v1789, 64
      %v1791 = vpop.permute.xlu0 %1790
      %v1793 = vunpack.c.l.b16 %v1756
      %v1794 = vpack.c.b16 %v1793, %v1793
      %v1796 = vshrl.u32 %v1786, 16
      %v1798 = vrot.slane %v1796, 1
      %v1799 = vshll.u32 %v1786, 16
      %v1801 = vrot.slane %v1799, 2
      %v1802 = vor.u32 %v1798, %v1801
      %v1804 = vshrl.u32 %v1794, 16
      %v1806 = vrot.slane %v1804, 1
      %v1807 = vshll.u32 %v1794, 16
      %v1809 = vrot.slane %v1807, 2
      %v1810 = vor.u32 %v1806, %v1809
      %v1811 = vsel %vm572, %v1802, %v1810
      %1812 = vrot.lane.b32.xlu0 %v1811, 96
      %v1813 = vpop.permute.xlu0 %1812
      %v1815 = vunpack.c.l.b16 %v1757
      %v1816 = vpack.c.b16 %v1766, %v1815
      %v1817 = vrot.slane %v1816, 2
      %v1818 = vrot.slane %v1794, 2
      %v1819 = vsel %vm595, %v1817, %v1818
      %v1821 = vunpack.c.l.b16 %v1758
      %v1822 = vpack.c.b16 %v1821, %v1821
      %v1824 = vshrl.u32 %v1816, 16
      %v1826 = vrot.slane %v1824, 2
      %v1827 = vshll.u32 %v1816, 16
      %v1829 = vrot.slane %v1827, 3
      %v1830 = vor.u32 %v1826, %v1829
      %v1832 = vshrl.u32 %v1822, 16
      %v1834 = vrot.slane %v1832, 2
      %v1835 = vshll.u32 %v1822, 16
      %v1837 = vrot.slane %v1835, 3
      %v1838 = vor.u32 %v1834, %v1837
      %v1839 = vsel %vm602, %v1830, %v1838
      %1840 = vrot.lane.b32.xlu0 %v1839, 32
      %v1841 = vpop.permute.xlu0 %1840
      %v1843 = vunpack.c.l.b16 %v1759
      %v1844 = vpack.c.b16 %v1766, %v1843
      %v1845 = vrot.slane %v1844, 3
      %v1846 = vrot.slane %v1822, 3
      %v1847 = vsel %vm625, %v1845, %v1846
      %1848 = vrot.lane.b32.xlu0 %v1847, 64
      %v1849 = vpop.permute.xlu0 %1848
      %v1851 = vunpack.c.l.b16 %v1760
      %v1852 = vpack.c.b16 %v1851, %v1851
      %v1854 = vshrl.u32 %v1844, 16
      %v1856 = vrot.slane %v1854, 3
      %v1857 = vshll.u32 %v1844, 16
      %v1859 = vrot.slane %v1857, 4
      %v1860 = vor.u32 %v1856, %v1859
      %v1862 = vshrl.u32 %v1852, 16
      %v1864 = vrot.slane %v1862, 3
      %v1865 = vshll.u32 %v1852, 16
      %v1867 = vrot.slane %v1865, 4
      %v1868 = vor.u32 %v1864, %v1867
      %v1869 = vsel %vm634, %v1860, %v1868
      %1870 = vrot.lane.b32.xlu0 %v1869, 96
      %v1871 = vpop.permute.xlu0 %1870
      %v1874 = vsel %vm654, %v1761, %v1783
      %v1876 = vsel %vm657, %v1874, %v1791
      %v1878 = vsel %vm660, %v1876, %v1813
      %v1882 = vsel %vm654, %v1819, %v1841
      %v1884 = vsel %vm657, %v1882, %v1849
      %v1886 = vsel %vm660, %v1884, %v1871
      %v1888 = vld [vmem:[%s3 + $0x200] sm:$0xf]
      %v1889 = vld [vmem:[%s3 + $0x204] sm:$0xf]
      %v1890 = vld [vmem:[%s3 + $0x208] sm:$0xf]
      %v1891 = vld [vmem:[%s3 + $0x20c] sm:$0xf]
      %v1892 = vld [vmem:[%s3 + $0x210] sm:$0xf]
      %v1893 = vld [vmem:[%s3 + $0x214] sm:$0xf]
      %v1894 = vld [vmem:[%s3 + $0x218] sm:$0xf]
      %v1895 = vld [vmem:[%s3 + $0x21c] sm:$0xf]
      %v1896 = vld [vmem:[%s3 + $0x220] sm:$0xf]
      %v1897 = vld [vmem:[%s3 + $0x224] sm:$0xf]
      %v1898 = vld [vmem:[%s3 + $0x228] sm:$0xf]
      %v1899 = vld [vmem:[%s3 + $0x22c] sm:$0xf]
      %v1900 = vld [vmem:[%s3 + $0x230] sm:$0xf]
      %v1901 = vld [vmem:[%s3 + $0x234] sm:$0xf]
      %v1902 = vld [vmem:[%s3 + $0x238] sm:$0xf]
      %v1903 = vld [vmem:[%s3 + $0x23c] sm:$0xf]
      %v1904 = vld [vmem:[%s3 + $0x240] sm:$0xf]
      %v1905 = vld [vmem:[%s3 + $0x244] sm:$0xf]
      %v1906 = vld [vmem:[%s3 + $0x248] sm:$0xf]
      %v1907 = vld [vmem:[%s3 + $0x24c] sm:$0xf]
      %v1908 = vld [vmem:[%s3 + $0x250] sm:$0xf]
      %v1909 = vld [vmem:[%s3 + $0x254] sm:$0xf]
      %v1910 = vld [vmem:[%s3 + $0x258] sm:$0xf]
      %v1911 = vld [vmem:[%s3 + $0x25c] sm:$0xf]
      %v1912 = vld [vmem:[%s3 + $0x260] sm:$0xf]
      %v1913 = vld [vmem:[%s3 + $0x264] sm:$0xf]
      %v1914 = vld [vmem:[%s3 + $0x268] sm:$0xf]
      %v1915 = vld [vmem:[%s3 + $0x26c] sm:$0xf]
      %v1916 = vld [vmem:[%s3 + $0x270] sm:$0xf]
      %v1917 = vld [vmem:[%s3 + $0x274] sm:$0xf]
      %v1918 = vld [vmem:[%s3 + $0x278] sm:$0xf]
      %v1919 = vld [vmem:[%s3 + $0x27c] sm:$0xf]
      %v1952 = vunpack.c.l.b16 %v1888
      %v1953 = vunpack.c.l.b16 %v1889
      %v1954 = vunpack.c.l.b16 %v1890
      %v1955 = vunpack.c.l.b16 %v1891
      %v1956 = vunpack.c.l.b16 %v1892
      %v1957 = vunpack.c.l.b16 %v1893
      %v1958 = vunpack.c.l.b16 %v1894
      %v1959 = vunpack.c.l.b16 %v1895
      %v1960 = vunpack.c.l.b16 %v1896
      %v1961 = vunpack.c.l.b16 %v1897
      %v1962 = vunpack.c.l.b16 %v1898
      %v1963 = vunpack.c.l.b16 %v1899
      %v1964 = vunpack.c.l.b16 %v1900
      %v1965 = vunpack.c.l.b16 %v1901
      %v1966 = vunpack.c.l.b16 %v1902
      %v1967 = vunpack.c.l.b16 %v1903
      %v1968 = vunpack.c.l.b16 %v1904
      %v1969 = vunpack.c.l.b16 %v1905
      %v1970 = vunpack.c.l.b16 %v1906
      %v1971 = vunpack.c.l.b16 %v1907
      %v1972 = vunpack.c.l.b16 %v1908
      %v1973 = vunpack.c.l.b16 %v1909
      %v1974 = vunpack.c.l.b16 %v1910
      %v1975 = vunpack.c.l.b16 %v1911
      %v1976 = vunpack.c.l.b16 %v1912
      %v1977 = vunpack.c.l.b16 %v1913
      %v1978 = vunpack.c.l.b16 %v1914
      %v1979 = vunpack.c.l.b16 %v1915
      %v1980 = vunpack.c.l.b16 %v1916
      %v1981 = vunpack.c.l.b16 %v1917
      %v1982 = vunpack.c.l.b16 %v1918
      %v1983 = vunpack.c.l.b16 %v1919
      %v1984 = vpack.c.b16 %v1953, %v1952
      %v1985 = vpack.c.b16 %v1955, %v1954
      %v1986 = vpack.c.b16 %v1957, %v1956
      %v1987 = vpack.c.b16 %v1959, %v1958
      %v1988 = vpack.c.b16 %v1961, %v1960
      %v1989 = vpack.c.b16 %v1963, %v1962
      %v1990 = vpack.c.b16 %v1965, %v1964
      %v1991 = vpack.c.b16 %v1967, %v1966
      %v1992 = vpack.c.b16 %v1969, %v1968
      %v1993 = vpack.c.b16 %v1971, %v1970
      %v1994 = vpack.c.b16 %v1973, %v1972
      %v1995 = vpack.c.b16 %v1975, %v1974
      %v1996 = vpack.c.b16 %v1977, %v1976
      %v1997 = vpack.c.b16 %v1979, %v1978
      %v1998 = vpack.c.b16 %v1981, %v1980
      %v1999 = vpack.c.b16 %v1983, %v1982
      %2016 = vmatprep.subr.bf16.mxu0 0
      %2017 = vmatpush1.bf16.msra.mxu0 %v1991
      %2018 = vmatprep.subr.bf16.mxu0 0
      %2019 = vmatpush1.bf16.msra.mxu0 %v1990
      %2020 = vmatprep.subr.bf16.mxu0 0
      %2021 = vmatpush1.bf16.msra.mxu0 %v1989
      %2022 = vmatprep.subr.bf16.mxu0 0
      %2023 = vmatpush1.bf16.msra.mxu0 %v1988
      %2024 = vmatprep.subr.bf16.mxu0 0
      %2025 = vmatpush1.bf16.msra.mxu0 %v1987
      %2026 = vmatprep.subr.bf16.mxu0 0
      %2027 = vmatpush1.bf16.msra.mxu0 %v1986
      %2028 = vmatprep.subr.bf16.mxu0 0
      %2029 = vmatpush1.bf16.msra.mxu0 %v1985
      %2030 = vmatprep.subr.bf16.mxu0 0
      %2031 = vmatpush1.bf16.msra.mxu0 %v1984
      %2032 = vmatprep.subr.bf16.mxu0 0
      %2033 = vmatpush2.bf16.msra.mxu0 %v1999
      %2034 = vmatprep.subr.bf16.mxu0 0
      %2035 = vmatpush2.bf16.msra.mxu0 %v1998
      %2036 = vmatprep.subr.bf16.mxu0 0
      %2037 = vmatpush2.bf16.msra.mxu0 %v1997
      %2038 = vmatprep.subr.bf16.mxu0 0
      %2039 = vmatpush2.bf16.msra.mxu0 %v1996
      %2040 = vmatprep.subr.bf16.mxu0 0
      %2041 = vmatpush2.bf16.msra.mxu0 %v1995
      %2042 = vmatprep.subr.bf16.mxu0 0
      %2043 = vmatpush2.bf16.msra.mxu0 %v1994
      %2044 = vmatprep.subr.bf16.mxu0 0
      %2045 = vmatpush2.bf16.msra.mxu0 %v1993
      %2046 = vmatprep.subr.bf16.mxu0 0
      %2047 = vmatpush2.bf16.msra.mxu0 %v1992
      %2048 = vmatprep.mubr.bf16.mxu0 %v1886
      %2049 = vmatmul.mubr.bf16.gmra.mxu0 %v1878
      %v2050 = vpop.f32.mrf.mxu0
      %v2051 = vadd.f32 0.0, %v2050
      %v2052 = vpop.f32.mrf.mxu0
      %v2053 = vpop.f32.mrf.mxu0
      %v2054 = vadd.f32 0.0, %v2053
      %v2055 = vpop.f32.mrf.mxu0
      %2056 = vdwg.mxu0
      %v2057 = vadd.f32 %v1750, %v2051
      %v2058 = vadd.f32 %v1751, %v2054
      %v2059 = vld [vmem:[%s4] sm:$0x1]
      %v2061 = vlaneseq
      %v2062 = vshrl.u32 %v2061, 7
      %v2063 = vsub.s32 0, %v2062
      %v2064 = vrot.slane %v2059, %v2063
      %v2066 = vadd.f32 %v2057, %v2064
      %v2067 = vadd.f32 %v2058, %v2064
      %vm2068 = vcmp.ge.s32.totalorder %v430, 1
      %vm2069 = vcmp.ge.s32.totalorder %v431, 1
      %v2070 = vsel %vm2068, 1, 0
      %v2071 = vsel %vm2069, 1, 0
      %vm2072 = vcmp.eq.s32.totalorder %v2070, 1
      %vm2073 = vcmp.eq.s32.totalorder %v2071, 1
      %vm2074 = vmpackc.low %vm2072, %vm2072
      %vm2075 = vmpackc.low %vm2073, %vm2073
      %v2076 = vsel %vm2074, 65537, 0
      %v2077 = vsel %vm2075, 65537, 0
      %vm2078 = vsmask.f32 1280
      %vm2079 = vsmask.f32 5392
      %vm2080 = vmor %vm2078, %vm2079
      %v2082 = vshrl.u32 %v2076, 16
      %v2084 = vrot.slane %v2082, 6
      %v2085 = vshll.u32 %v2076, 16
      %v2087 = vrot.slane %v2085, 7
      %v2088 = vor.u32 %v2084, %v2087
      %v2089 = vrot.slane %v2088, 4
      %v2091 = vshrl.u32 %v2077, 16
      %v2093 = vrot.slane %v2091, 6
      %v2094 = vshll.u32 %v2077, 16
      %v2096 = vrot.slane %v2094, 7
      %v2097 = vor.u32 %v2093, %v2096
      %v2098 = vsel %vm2080, %v2089, %v2097
      %v2099 = vrot.slane %v2097, 4
      %vm2100 = vcmp.ne.s16.totalorder %v2088, 0
      %vm2101 = vcmp.ne.s16.totalorder %v2098, 0
      %vm2102 = vcmp.ne.s16.totalorder %v2099, 0
      %vm2103 = vsmask.f32 7440
      %vm2104 = vmor %vm523, %vm2103
      %v2106 = vshrl.u32 %v309, 16
      %v2108 = vrot.slane %v2106, 4
      %v2109 = vshll.u32 %v309, 16
      %v2111 = vrot.slane %v2109, 5
      %v2112 = vor.u32 %v2108, %v2111
      %v2113 = vrot.slane %v2112, 4
      %v2115 = vshll.u32 %v310, 16
      %v2117 = vrot.slane %v2115, 5
      %v2118 = vsel %vm2104, %v2113, %v2117
      %v2119 = vshrl.u32 %v310, 16
      %v2121 = vrot.slane %v2119, 4
      %v2122 = vor.u32 %v2121, %v2117
      %v2123 = vrot.slane %v2122, 4
      %v2125 = vshll.u32 %v311, 16
      %v2127 = vrot.slane %v2125, 5
      %v2128 = vsel %vm2104, %v2123, %v2127
      %v2129 = vshrl.u32 %v311, 16
      %v2131 = vrot.slane %v2129, 4
      %v2132 = vor.u32 %v2131, %v2127
      %v2133 = vrot.slane %v2132, 4
      %v2137 = vsel %vm2100, %v309, %v2118
      %v2138 = vsel %vm2101, %v310, %v2128
      %v2139 = vsel %vm2102, %v311, %v2133
      %v2140 = vadd.s32 %v430, 1
      %v2141 = vadd.s32 %v431, 1
      %vm2142 = vcmp.lt.s32.totalorder %v2140, 16
      %vm2143 = vcmp.lt.s32.totalorder %v2141, 16
      %v2144 = vsel %vm2142, 1, 0
      %v2145 = vsel %vm2143, 1, 0
      %vm2146 = vcmp.eq.s32.totalorder %v2144, 1
      %vm2147 = vcmp.eq.s32.totalorder %v2145, 1
      %vm2148 = vmpackc.low %vm2146, %vm2146
      %vm2149 = vmpackc.low %vm2147, %vm2147
      %v2150 = vsel %vm2148, 65537, 0
      %v2151 = vsel %vm2149, 65537, 0
      %vm2152 = vsmask.f32 2304
      %vm2153 = vsmask.f32 6416
      %vm2154 = vmor %vm2152, %vm2153
      %v2156 = vshrl.u32 %v2150, 16
      %v2158 = vrot.slane %v2156, 5
      %v2159 = vshll.u32 %v2150, 16
      %v2161 = vrot.slane %v2159, 6
      %v2162 = vor.u32 %v2158, %v2161
      %v2163 = vrot.slane %v2162, 4
      %v2165 = vshrl.u32 %v2151, 16
      %v2167 = vrot.slane %v2165, 5
      %v2168 = vshll.u32 %v2151, 16
      %v2170 = vrot.slane %v2168, 6
      %v2171 = vor.u32 %v2167, %v2170
      %v2172 = vsel %vm2154, %v2163, %v2171
      %v2173 = vrot.slane %v2171, 4
      %vm2174 = vcmp.ne.s16.totalorder %v2162, 0
      %vm2175 = vcmp.ne.s16.totalorder %v2172, 0
      %vm2176 = vcmp.ne.s16.totalorder %v2173, 0
      %vm2177 = vsmask.f32 256
      %vm2178 = vsmask.f32 4368
      %vm2179 = vmor %vm2177, %vm2178
      %v2180 = vrot.slane %v2106, 7
      %v2181 = vor.u32 %v2180, %v2109
      %v2182 = vrot.slane %v2180, 4
      %v2183 = vrot.slane %v2119, 7
      %v2184 = vor.u32 %v2183, %v2115
      %v2185 = vsel %vm2179, %v2182, %v2184
      %v2186 = vrot.slane %v2183, 4
      %v2187 = vrot.slane %v2129, 7
      %v2188 = vor.u32 %v2187, %v2125
      %v2189 = vsel %vm2179, %v2186, %v2188
      %v2193 = vsel %vm2174, %v309, %v2181
      %v2194 = vsel %vm2175, %v310, %v2185
      %v2195 = vsel %vm2176, %v311, %v2189
      %v2196 = vmax.bf16 %v2137, %v2118
      %v2197 = vmax.bf16 %v2138, %v2128
      %v2198 = vmax.bf16 %v2139, %v2133
      %vm2202 = vcmask 1042432
      %vm2203 = vcmask 1046532
      %vm2204 = vmor %vm2202, %vm2203
      %v2205 = vrot.slane %v2193, 5
      %v2206 = vrot.slane %v2205, 4
      %v2207 = vrot.slane %v2194, 5
      %v2208 = vsel %vm2204, %v2206, %v2207
      %v2209 = vrot.slane %v2207, 4
      %v2210 = vrot.slane %v2195, 5
      %v2211 = vsel %vm2204, %v2209, %v2210
      %v2212 = vrot.slane %v2210, 4
      %v2216 = vmax.bf16 %v2196, %v2208
      %v2217 = vmax.bf16 %v2197, %v2211
      %v2218 = vmax.bf16 %v2198, %v2212
      %v2219 = vld [vmem:[%s5] sm:$0x3]
      %v2220 = vld [vmem:[%s6] sm:$0x1]
      %v2222 = vlaneseq
      %v2223 = vshrl.u32 %v2222, 7
      %v2224 = vsub.s32 0, %v2223
      %v2225 = vrot.slane %v2220, %v2224
      %v2230 = vunpack.c.l.b16 %v2216
      %v2231 = vunpack.c.l.b16 %v2217
      %v2232 = vunpack.c.l.b16 %v2218
      %v2233 = vpack.c.b16 %v2231, %v2230
      %v2234 = vpack.c.b16 %v2232, %v2232
      %v2236 = vshrl.u32 %v2233, 16
      %v2238 = vrot.slane %v2236, 1
      %v2239 = vshll.u32 %v2233, 16
      %v2241 = vrot.slane %v2239, 2
      %v2242 = vor.u32 %v2238, %v2241
      %v2244 = vshrl.u32 %v2234, 16
      %v2246 = vrot.slane %v2244, 1
      %v2247 = vshll.u32 %v2234, 16
      %v2249 = vrot.slane %v2247, 2
      %v2250 = vor.u32 %v2246, %v2249
      %v2251 = vsel %vm572, %v2242, %v2250
      %v2253 = vsel %vm340, %v2251, 0
      %v2256 = vsel %vm353, %v2219, 0
      %2258 = vmatprep.subr.bf16.mxu0 0
      %2259 = vmatpush1.bf16.msra.mxu0 0
      %2260 = vmatprep.subr.bf16.mxu0 0
      %2261 = vmatpush1.bf16.msra.mxu0 0
      %2262 = vmatprep.subr.bf16.mxu0 0
      %2263 = vmatpush1.bf16.msra.mxu0 0
      %2264 = vmatprep.subr.bf16.mxu0 0
      %2265 = vmatpush1.bf16.msra.mxu0 0
      %2266 = vmatprep.subr.bf16.mxu0 0
      %2267 = vmatpush1.bf16.msra.mxu0 0
      %2268 = vmatprep.subr.bf16.mxu0 0
      %2269 = vmatpush1.bf16.msra.mxu0 0
      %2270 = vmatprep.subr.bf16.mxu0 0
      %2271 = vmatpush1.bf16.msra.mxu0 0
      %2272 = vmatprep.subr.bf16.mxu0 0
      %2273 = vmatpush1.bf16.msra.mxu0 %v2256
      %2274 = vmatprep.subr.bf16.mxu0 0
      %2275 = vmatpush2.bf16.msra.mxu0 0
      %2276 = vmatprep.subr.bf16.mxu0 0
      %2277 = vmatpush2.bf16.msra.mxu0 0
      %2278 = vmatprep.subr.bf16.mxu0 0
      %2279 = vmatpush2.bf16.msra.mxu0 0
      %2280 = vmatprep.subr.bf16.mxu0 0
      %2281 = vmatpush2.bf16.msra.mxu0 0
      %2282 = vmatprep.subr.bf16.mxu0 0
      %2283 = vmatpush2.bf16.msra.mxu0 0
      %2284 = vmatprep.subr.bf16.mxu0 0
      %2285 = vmatpush2.bf16.msra.mxu0 0
      %2286 = vmatprep.subr.bf16.mxu0 0
      %2287 = vmatpush2.bf16.msra.mxu0 0
      %2288 = vmatprep.subr.bf16.mxu0 0
      %2289 = vmatpush2.bf16.msra.mxu0 0
      %2290 = vmatprep.mubr.bf16.mxu0 0
      %2291 = vmatmul.mubr.bf16.gmra.mxu0 %v2253
      %v2292 = vpop.f32.mrf.mxu0
      %v2293 = vadd.f32 %v2225, %v2292
      %v2294 = vpop.f32.mrf.mxu0
      %v2295 = vpop.f32.mrf.mxu0
      %v2296 = vadd.f32 %v2225, %v2295
      %v2297 = vpop.f32.mrf.mxu0
      %2298 = vdwg.mxu0
      %2301 = vrot.lane.b32.xlu0 %v2293, 24
      %v2302 = vpop.permute.xlu0 %2301
      %2303 = vrot.lane.b32.xlu0 %v2296, 24
      %v2304 = vpop.permute.xlu0 %2303
      %vm2307 = vcmask 195584
      %v2308 = vsel %vm2307, %v2066, %v2302
      %v2309 = vsel %vm2307, %v2067, %v2304
      %2310 = vxpose.xlu0.b32.start [1/16] %v2308, 128
      %2311 = vxpose.xlu0.b32.cont [2/16] %v2309, 128
      %2312 = vxpose.xlu0.b32.cont [3/16] 0.0, 128
      %2313 = vxpose.xlu0.b32.cont [4/16] 0.0, 128
      %2314 = vxpose.xlu0.b32.cont [5/16] 0.0, 128
      %2315 = vxpose.xlu0.b32.cont [6/16] 0.0, 128
      %2316 = vxpose.xlu0.b32.cont [7/16] 0.0, 128
      %2317 = vxpose.xlu0.b32.cont [8/16] 0.0, 128
      %2318 = vxpose.xlu0.b32.cont [9/16] 0.0, 128
      %2319 = vxpose.xlu0.b32.cont [10/16] 0.0, 128
      %2320 = vxpose.xlu0.b32.cont [11/16] 0.0, 128
      %2321 = vxpose.xlu0.b32.cont [12/16] 0.0, 128
      %2322 = vxpose.xlu0.b32.cont [13/16] 0.0, 128
      %2323 = vxpose.xlu0.b32.cont [14/16] 0.0, 128
      %2324 = vxpose.xlu0.b32.cont [15/16] 0.0, 128
      %2325 = vxpose.xlu0.b32.end [16/16] 0.0, 128
      %v2326 = vpop.trf.xlu0
      %v2327 = vpop.trf.xlu0
      %v2328 = vpop.trf.xlu0
      %v2329 = vpop.trf.xlu0
      %v2330 = vpop.trf.xlu0
      %v2331 = vpop.trf.xlu0
      %v2332 = vpop.trf.xlu0
      %v2333 = vpop.trf.xlu0
      %v2334 = vpop.trf.xlu0
      %v2335 = vpop.trf.xlu0
      %v2336 = vpop.trf.xlu0
      %v2337 = vpop.trf.xlu0
      %v2338 = vpop.trf.xlu0
      %v2339 = vpop.trf.xlu0
      %v2340 = vpop.trf.xlu0
      %v2341 = vpop.trf.xlu0
      %vm2342 = vcmask 130048
      %2343 = vst.msk [vmem:[%s298] sm:$0xff] %vm2342, %v2326
      %2344 = vst.msk [vmem:[%s298 + $0x8] sm:$0xff] %vm2342, %v2327
      %2345 = vst.msk [vmem:[%s298 + $0x10] sm:$0xff] %vm2342, %v2328
      %2346 = vst.msk [vmem:[%s298 + $0x18] sm:$0xff] %vm2342, %v2329
      %p2347 = scmp.lt.s32.totalorder %s22, 1
      %s2348 = scalar_select %p2347, %s22, 1
      %p2349 = scmp.lt.s32.totalorder %s23, 0
      %s2350 = scalar_select %p2349, %s23, 0
      %s2351 = smul.addr %s2348, 4
      %s2352 = sadd.s32 %s2350, %s2351
      %s2353 = smul.addr %s2352, 8
      %s2354 = scalar_lea.vmem %s7, %s2353
      // Predicated region
      $region49: #{tpu_custom_call.1} parent=47 // pred_check
        %p2355 = pneg %p202
      $region50: #{tpu_custom_call.1} parent=47 // pred_check_branch
        %2357 = sbr.rel (%p2355) target = $region52
      $region51: #{tpu_custom_call.1} parent=47 // pred_region
        _
      $region52: #{tpu_custom_call.1} parent=47 // pred_fallthru
        _
    $region48: #{tpu_custom_call.1} parent=5 // pred_fallthru
      _
    %p2358 = scmp.le.s32.totalorder 2, %s13
    // Predicated region
    $region53: #{tpu_custom_call.1} parent=5 // pred_check
      %p2359 = pneg %p2358
    $region54: #{tpu_custom_call.1} parent=5 // pred_check_branch
      %2361 = sbr.rel (%p2359) target = $region56
    $region55: #{tpu_custom_call.1} parent=5 // pred_region
      %s2362 = ssub.s32 %s13, 2
      // Predicated region
      $region57: #{tpu_custom_call.1} parent=55 // pred_check
        %p2363 = pneg %p208
      $region58: #{tpu_custom_call.1} parent=55 // pred_check_branch
        %2365 = sbr.rel (%p2363) target = $region60
      $region59: #{tpu_custom_call.1} parent=55 // pred_region
        %p2366 = scmp.lt.s32.totalorder %s24, 1
        %s2367 = scalar_select %p2366, %s24, 1
        %p2368 = scmp.lt.s32.totalorder %s25, 0
        %s2369 = scalar_select %p2368, %s25, 0
        %s2370 = smul.addr %s2367, 4
        %s2371 = sadd.s32 %s2369, %s2370
        %s2372 = smul.addr %s2371, 8
        %s2373 = scalar_lea.vmem %s7, %s2372
      $region60: #{tpu_custom_call.1} parent=55 // pred_fallthru
        _
    $region56: #{tpu_custom_call.1} parent=5 // pred_fallthru
      _
  $region6: #{tpu_custom_call.1} parent=0 // loop_footer
    %s17 = sadd.s32 1, %s13
  $region7: #{tpu_custom_call.1} parent=0 // loop_footer_branch
    %12 = sbr.rel target = $region3
  $region8: #{tpu_custom_call.1} parent=0 // loop_exit
    _

</llo_original>
